<compile_context>
chip_gen: v5e
topology: v5e:2x2
jax: 0.10.0
libtpu: 0.0.40
codegen_flags: <defaults>
</compile_context>

<pallas_src>
import functools
import math

import jax
import jax.numpy as jnp
from jax.experimental import pallas as pl
from jax.experimental.pallas import tpu as pltpu


def _basic_trans_kernel(xfull_ref, xb_ref, dwexp_ref, bng_ref, bnb_ref,
                        qkvw_ref, ctw_ref, ctb_ref, gng_ref, gnb_ref, out_ref,
                        *, heads, head_dim, scale, r3, nd):
    eps = 1e-5
    tc = heads * head_dim

    dwexp = dwexp_ref[...]          # (C, r3*C)   block-expanded depthwise weight

    # ---- 1a. depthwise Conv3d as one MXU matmul on the WHOLE batch ------------
    # (lanes = B*Nd) -> used only for BatchNorm batch statistics.
    y_full = jax.lax.dot_general(dwexp, xfull_ref[...], (((1,), (0,)), ((), ())),
                                 preferred_element_type=jnp.float32)   # (C, B*Nd)

    # ---- 2. BatchNorm3d training-mode stats, single pass (biased variance) ----
    # TODO(synk): running-mean/var buffer updates are PyTorch state mutation and
    # are not reproduced (they do not affect this forward output).
    inv_n = 1.0 / float(y_full.shape[1])
    bmean = jnp.sum(y_full, axis=1, keepdims=True) * inv_n              # (C, 1)
    bmsq = jnp.sum(y_full * y_full, axis=1, keepdims=True) * inv_n
    bvar = jnp.maximum(bmsq - bmean * bmean, 0.0)
    binv = jax.lax.rsqrt(bvar + eps)

    # ---- 1b./2b. this grid step's sample: conv + BN normalize -----------------
    y = jax.lax.dot_general(dwexp, xb_ref[...], (((1,), (0,)), ((), ())),
                            preferred_element_type=jnp.float32)         # (C, Nd)
    yh = (y - bmean) * (binv * bng_ref[...]) + bnb_ref[...]             # (C, Nd)

    # ---- 3. qkv 1x1x1 Conv3d (no bias), rows pre-permuted to [Q | K | V] ------
    z = jax.lax.dot_general(qkvw_ref[...], yh, (((1,), (0,)), ((), ())),
                            preferred_element_type=jnp.float32)         # (3*tc, Nd)

    # ---- 4./5. per-head attention, batched over heads -------------------------
    q = z[0:tc].reshape(heads, head_dim, nd)
    k = z[tc:2 * tc].reshape(heads, head_dim, nd)
    v = z[2 * tc:3 * tc].reshape(heads, head_dim, nd)

    logits = jax.lax.dot_general(q * scale, k, (((1,), (1,)), ((0,), (0,))),
                                 preferred_element_type=jnp.float32)    # (h, Nd, Nd)
    m = jnp.max(logits, axis=-1, keepdims=True)
    e = jnp.exp(logits - m)
    attn = e * pl.reciprocal(jnp.sum(e, axis=-1, keepdims=True), approx=True)

    a = jax.lax.dot_general(v, attn, (((2,), (2,)), ((0,), (0,))),
                            preferred_element_type=jnp.float32)         # (h, hd, Nd)
    a = a.reshape(tc, nd)                                               # (tc, Nd)

    # ---- 6./7. ConvTranspose3d + GroupNorm(1 group), stats computed
    #            algebraically from `a` (no r3 expansion for the stats pass) ---
    ctw = ctw_ref[...]                                  # (tc, r3)
    ctb = ctb_ref[...]                                  # (tc, 1)
    w_sum = jnp.sum(ctw, axis=1, keepdims=True)         # (tc, 1)
    w_sq = jnp.sum(ctw * ctw, axis=1, keepdims=True)    # (tc, 1)
    a_sum = jnp.sum(a, axis=1, keepdims=True)           # (tc, 1)
    a_sq = jnp.sum(a * a, axis=1, keepdims=True)        # (tc, 1)

    g_tot = float(tc * r3 * nd)
    pn = float(r3 * nd)
    ssum = jnp.sum(a_sum * w_sum + pn * ctb)
    ssq = jnp.sum(a_sq * w_sq + 2.0 * ctb * a_sum * w_sum + pn * ctb * ctb)
    gmean = ssum / g_tot
    gvar = jnp.maximum(ssq / g_tot - gmean * gmean, 0.0)
    ginv = jax.lax.rsqrt(gvar + eps)

    # fused transpose-conv + normalize: out_p = a * (w_p*ginv*gamma) + shift
    gg = gng_ref[...] * ginv                             # (tc, 1)
    shift = (ctb - gmean) * gg + gnb_ref[...]            # (tc, 1)
    scales = ctw * gg                                    # (tc, r3)
    patches = [a * scales[:, p:p + 1] + shift for p in range(r3)]
    slab = jnp.concatenate(patches, axis=1)              # (tc, r3*Nd) lane-dense
    out_ref[...] = slab.astype(out_ref.dtype)            # single dense store


def basic_trans_forward(x, params, *, r, heads, head_dim):
    B, C, H, W, Z = x.shape
    assert H % r == 0 and W % r == 0 and Z % r == 0
    Hd, Wd, Zd = H // r, W // r, Z // r
    Nd = Hd * Wd * Zd
    r3 = r ** 3
    tc = heads * head_dim
    scale = head_dim ** (-0.5)

    # NCDHW -> patch layout; patch index p = i*r*r + j*r + k (PyTorch flattening)
    xp = x.reshape(B, C, Hd, r, Wd, r, Zd, r)
    xp = xp.transpose(0, 3, 5, 7, 1, 2, 4, 6).reshape(B, r3, C, Nd)
    x_b = xp.reshape(B, r3 * C, Nd)                                # per-sample blocks
    x_full = jnp.transpose(x_b, (1, 0, 2)).reshape(r3 * C, B * Nd)  # batch in lanes

    # depthwise conv weight expanded to one matmul: Wexp[c, p*C + c'] = w[c,p]*[c==c']
    eye = jnp.eye(C, dtype=jnp.float32)
    wexp = (params["dw_w"][:, :, None] * eye[:, None, :]).reshape(C, r3 * C)

    # permute qkv rows from (head, {q,k,v}, hd) to ({q,k,v}, head, hd)
    qkv_perm = params["qkv_w"].reshape(heads, 3, head_dim, C)
    qkv_perm = qkv_perm.transpose(1, 0, 2, 3).reshape(3 * tc, C)

    kernel = functools.partial(_basic_trans_kernel, heads=heads, head_dim=head_dim,
                               scale=scale, r3=r3, nd=Nd)

    in_specs = [
        pl.BlockSpec((r3 * C, B * Nd), lambda b: (0, 0)),        # x_full (whole batch)
        pl.BlockSpec((None, r3 * C, Nd), lambda b: (b, 0, 0)),   # x_b (this sample)
        pl.BlockSpec((C, r3 * C), lambda b: (0, 0)),             # expanded dw weight
        pl.BlockSpec((C, 1), lambda b: (0, 0)),                  # bn gamma
        pl.BlockSpec((C, 1), lambda b: (0, 0)),                  # bn beta
        pl.BlockSpec((3 * tc, C), lambda b: (0, 0)),             # qkv weight (perm)
        pl.BlockSpec((tc, r3), lambda b: (0, 0)),                # conv_trans weight
        pl.BlockSpec((tc, 1), lambda b: (0, 0)),                 # conv_trans bias
        pl.BlockSpec((tc, 1), lambda b: (0, 0)),                 # gn gamma
        pl.BlockSpec((tc, 1), lambda b: (0, 0)),                 # gn beta
    ]
    out_spec = pl.BlockSpec((None, tc, r3 * Nd), lambda b: (b, 0, 0))

    out_p = pl.pallas_call(
        kernel,
        out_shape=jax.ShapeDtypeStruct((B, tc, r3 * Nd), jnp.float32),
        grid=(B,),
        in_specs=in_specs,
        out_specs=out_spec,
        compiler_params=pltpu.CompilerParams(
            dimension_semantics=("parallel",),
            vmem_limit_bytes=32 * 1024 * 1024),
    )(x_full, x_b, wexp, params["bn_g"], params["bn_b"], qkv_perm,
      params["ct_w"], params["ct_b"], params["gn_g"], params["gn_b"])

    # lane-dense slab (B, tc, r3*Nd) -> NCDHW (B, tc, H, W, Z)
    # TODO(synk): if these 8-D transposes ever dominate, fold patchify into the
    # kernel's DMA pattern via index_maps instead of wrapper reshapes.
    out = out_p.reshape(B, tc, r, r, r, Hd, Wd, Zd)
    out = out.transpose(0, 1, 5, 2, 6, 3, 7, 4).reshape(B, tc, H, W, Z)
    return out


def init_params(key, in_channels, trans_channels, r):
    """Deterministic synthetic parameters (shapes match the PyTorch module)."""
    r3 = r ** 3
    ks = jax.random.split(key, 8)
    u = jax.random.uniform
    n = jax.random.normal
    p = {}
    # Conv3d(C, C, k=r, s=r, groups=C, bias=False): weight (C, 1, r, r, r) -> (C, r^3)
    p["dw_w"] = u(ks[0], (in_channels, r3), jnp.float32,
                  -1.0 / math.sqrt(r3), 1.0 / math.sqrt(r3))
    # BatchNorm3d affine
    p["bn_g"] = 1.0 + 0.05 * n(ks[1], (in_channels, 1), jnp.float32)
    p["bn_b"] = 0.05 * n(ks[2], (in_channels, 1), jnp.float32)
    # Conv3d(C, 3*Tc, k=1, bias=False): weight (3*Tc, C, 1, 1, 1) -> (3*Tc, C)
    p["qkv_w"] = u(ks[3], (3 * trans_channels, in_channels), jnp.float32,
                   -1.0 / math.sqrt(in_channels), 1.0 / math.sqrt(in_channels))
    # ConvTranspose3d(Tc, Tc, k=r, s=r, groups=Tc): weight (Tc, 1, r, r, r) -> (Tc, r^3)
    p["ct_w"] = u(ks[4], (trans_channels, r3), jnp.float32,
                  -1.0 / math.sqrt(r3), 1.0 / math.sqrt(r3))
    p["ct_b"] = u(ks[5], (trans_channels, 1), jnp.float32,
                  -1.0 / math.sqrt(r3), 1.0 / math.sqrt(r3))
    # GroupNorm affine
    p["gn_g"] = 1.0 + 0.05 * n(ks[6], (trans_channels, 1), jnp.float32)
    p["gn_b"] = 0.05 * n(ks[7], (trans_channels, 1), jnp.float32)
    return p


if __name__ == "__main__":
    # BasicTrans(in_channels=4, Trans_channels=32, r=2, heads=4) on x: (2, 4, 8, 8, 8)
    B, C_IN, TC, R, HEADS = 2, 4, 32, 2, 4
    H = W = Z = 8
    key = jax.random.PRNGKey(0)
    kx, kp = jax.random.split(key)
    x = jax.random.normal(kx, (B, C_IN, H, W, Z), jnp.float32)
    params = init_params(kp, C_IN, TC, R)

    out = basic_trans_forward(x, params, r=R, heads=HEADS, head_dim=TC // HEADS)
    out = jax.block_until_ready(out)
    assert out.shape == (B, TC, H, W, Z), out.shape
    assert bool(jnp.all(jnp.isfinite(out)))
    print("KERNEL_OK")
</pallas_src>

<mosaic_0001>
module attributes {stable_mosaic.version = 11 : i64} {
  func.func @_basic_trans_kernel(%arg0: i32, %arg1: memref<32x128xf32, #tpu.memory_space<vmem>>, %arg2: memref<1x32x64xf32, #tpu.memory_space<vmem>>, %arg3: memref<4x32xf32, #tpu.memory_space<vmem>>, %arg4: memref<4x1xf32, #tpu.memory_space<vmem>>, %arg5: memref<4x1xf32, #tpu.memory_space<vmem>>, %arg6: memref<96x4xf32, #tpu.memory_space<vmem>>, %arg7: memref<32x8xf32, #tpu.memory_space<vmem>>, %arg8: memref<32x1xf32, #tpu.memory_space<vmem>>, %arg9: memref<32x1xf32, #tpu.memory_space<vmem>>, %arg10: memref<32x1xf32, #tpu.memory_space<vmem>>, %arg11: memref<1x32x512xf32, #tpu.memory_space<vmem>>) attributes {dimension_semantics = [#tpu.dimension_semantics<parallel>], iteration_bounds = array<i64: 2>, scalar_prefetch = 0 : i64, scratch_operands = 0 : i64, tpu.core_type = #tpu.core_type<tc>, window_params = [{pipeline_mode = #tpu.pipeline_mode<synchronous>, transform_indices = @transform_0, window_bounds = array<i64: 32, 128>}, {transform_indices = @transform_1, window_bounds = array<i64: 1, 32, 64>}, {pipeline_mode = #tpu.pipeline_mode<synchronous>, transform_indices = @transform_2, window_bounds = array<i64: 4, 32>}, {pipeline_mode = #tpu.pipeline_mode<synchronous>, transform_indices = @transform_3, window_bounds = array<i64: 4, 1>}, {pipeline_mode = #tpu.pipeline_mode<synchronous>, transform_indices = @transform_4, window_bounds = array<i64: 4, 1>}, {pipeline_mode = #tpu.pipeline_mode<synchronous>, transform_indices = @transform_5, window_bounds = array<i64: 96, 4>}, {pipeline_mode = #tpu.pipeline_mode<synchronous>, transform_indices = @transform_6, window_bounds = array<i64: 32, 8>}, {pipeline_mode = #tpu.pipeline_mode<synchronous>, transform_indices = @transform_7, window_bounds = array<i64: 32, 1>}, {pipeline_mode = #tpu.pipeline_mode<synchronous>, transform_indices = @transform_8, window_bounds = array<i64: 32, 1>}, {pipeline_mode = #tpu.pipeline_mode<synchronous>, transform_indices = @transform_9, window_bounds = array<i64: 32, 1>}, {transform_indices = @transform_10, window_bounds = array<i64: 1, 32, 512>}]} {
    %c0 = arith.constant 0 : index
    %c0_0 = arith.constant 0 : index
    %0 = vector.load %arg3[%c0, %c0_0] : memref<4x32xf32, #tpu.memory_space<vmem>>, vector<4x32xf32>
    %c0_1 = arith.constant 0 : index
    %c0_2 = arith.constant 0 : index
    %1 = vector.load %arg1[%c0_1, %c0_2] : memref<32x128xf32, #tpu.memory_space<vmem>>, vector<32x128xf32>
    %cst = arith.constant dense<0.000000e+00> : vector<4x128xf32>
    %2 = tpu.matmul %0, %1, %cst {dimension_numbers = #tpu.dot_dimension_numbers<[1], [0], [0], [1], [0, 0, 1, 1], [], []>} : vector<4x32xf32>, vector<32x128xf32>, vector<4x128xf32> -> vector<4x128xf32>
    %cst_3 = arith.constant dense<0.000000e+00> : vector<4xf32>
    %3 = vector.multi_reduction <add>, %2, %cst_3 [1] : vector<4x128xf32> to vector<4xf32>
    %4 = vector.shape_cast %3 : vector<4xf32> to vector<4x1xf32>
    %cst_4 = arith.constant 7.812500e-03 : f32
    %5 = vector.broadcast %cst_4 : f32 to vector<4x1xf32>
    %6 = arith.mulf %4, %5 : vector<4x1xf32>
    %7 = arith.mulf %2, %2 : vector<4x128xf32>
    %cst_5 = arith.constant dense<0.000000e+00> : vector<4xf32>
    %8 = vector.multi_reduction <add>, %7, %cst_5 [1] : vector<4x128xf32> to vector<4xf32>
    %9 = vector.shape_cast %8 : vector<4xf32> to vector<4x1xf32>
    %cst_6 = arith.constant 7.812500e-03 : f32
    %10 = vector.broadcast %cst_6 : f32 to vector<4x1xf32>
    %11 = arith.mulf %9, %10 : vector<4x1xf32>
    %12 = arith.mulf %6, %6 : vector<4x1xf32>
    %13 = arith.subf %11, %12 : vector<4x1xf32>
    %cst_7 = arith.constant 0.000000e+00 : f32
    %14 = vector.broadcast %cst_7 : f32 to vector<4x1xf32>
    %15 = arith.maximumf %13, %14 : vector<4x1xf32>
    %cst_8 = arith.constant 9.99999974E-6 : f32
    %16 = vector.broadcast %cst_8 : f32 to vector<4x1xf32>
    %17 = arith.addf %15, %16 : vector<4x1xf32>
    %18 = math.rsqrt %17 : vector<4x1xf32>
    %c0_9 = arith.constant 0 : index
    %c0_10 = arith.constant 0 : index
    %c0_11 = arith.constant 0 : index
    %19 = vector.load %arg2[%c0_9, %c0_10, %c0_11] : memref<1x32x64xf32, #tpu.memory_space<vmem>>, vector<1x32x64xf32>
    %20 = vector.shape_cast %19 : vector<1x32x64xf32> to vector<32x64xf32>
    %cst_12 = arith.constant dense<0.000000e+00> : vector<4x64xf32>
    %21 = tpu.matmul %0, %20, %cst_12 {dimension_numbers = #tpu.dot_dimension_numbers<[1], [0], [0], [1], [0, 0, 1, 1], [], []>} : vector<4x32xf32>, vector<32x64xf32>, vector<4x64xf32> -> vector<4x64xf32>
    %22 = vector.broadcast %6 : vector<4x1xf32> to vector<4x64xf32>
    %23 = arith.subf %21, %22 : vector<4x64xf32>
    %c0_13 = arith.constant 0 : index
    %c0_14 = arith.constant 0 : index
    %24 = vector.load %arg4[%c0_13, %c0_14] : memref<4x1xf32, #tpu.memory_space<vmem>>, vector<4x1xf32>
    %25 = arith.mulf %18, %24 : vector<4x1xf32>
    %26 = vector.broadcast %25 : vector<4x1xf32> to vector<4x64xf32>
    %27 = arith.mulf %23, %26 : vector<4x64xf32>
    %c0_15 = arith.constant 0 : index
    %c0_16 = arith.constant 0 : index
    %28 = vector.load %arg5[%c0_15, %c0_16] : memref<4x1xf32, #tpu.memory_space<vmem>>, vector<4x1xf32>
    %29 = vector.broadcast %28 : vector<4x1xf32> to vector<4x64xf32>
    %30 = arith.addf %27, %29 : vector<4x64xf32>
    %c0_17 = arith.constant 0 : index
    %c0_18 = arith.constant 0 : index
    %31 = vector.load %arg6[%c0_17, %c0_18] : memref<96x4xf32, #tpu.memory_space<vmem>>, vector<96x4xf32>
    %cst_19 = arith.constant dense<0.000000e+00> : vector<96x64xf32>
    %32 = tpu.matmul %31, %30, %cst_19 {dimension_numbers = #tpu.dot_dimension_numbers<[1], [0], [0], [1], [0, 0, 1, 1], [], []>} : vector<96x4xf32>, vector<4x64xf32>, vector<96x64xf32> -> vector<96x64xf32>
    %33 = vector.extract_strided_slice %32 {offsets = [0, 0], sizes = [32, 64], strides = [1, 1]} : vector<96x64xf32> to vector<32x64xf32>
    %34 = vector.shape_cast %33 : vector<32x64xf32> to vector<4x8x64xf32>
    %35 = vector.extract_strided_slice %32 {offsets = [32, 0], sizes = [32, 64], strides = [1, 1]} : vector<96x64xf32> to vector<32x64xf32>
    %36 = vector.shape_cast %35 : vector<32x64xf32> to vector<4x8x64xf32>
    %37 = vector.extract_strided_slice %32 {offsets = [64, 0], sizes = [32, 64], strides = [1, 1]} : vector<96x64xf32> to vector<32x64xf32>
    %38 = vector.shape_cast %37 : vector<32x64xf32> to vector<4x8x64xf32>
    %cst_20 = arith.constant 0.353553385 : f32
    %39 = vector.broadcast %cst_20 : f32 to vector<4x8x64xf32>
    %40 = arith.mulf %34, %39 : vector<4x8x64xf32>
    %cst_21 = arith.constant dense<0.000000e+00> : vector<4x64x64xf32>
    %41 = tpu.matmul %40, %36, %cst_21 {dimension_numbers = #tpu.dot_dimension_numbers<[1], [1], [2], [2], [0, 0, 0, 2, 1, 2], [0], [0]>} : vector<4x8x64xf32>, vector<4x8x64xf32>, vector<4x64x64xf32> -> vector<4x64x64xf32>
    %cst_22 = arith.constant dense<0xFF800000> : vector<4x64xf32>
    %42 = vector.multi_reduction <maximumf>, %41, %cst_22 [2] : vector<4x64x64xf32> to vector<4x64xf32>
    %43 = vector.shape_cast %42 : vector<4x64xf32> to vector<4x64x1xf32>
    %44 = vector.broadcast %43 : vector<4x64x1xf32> to vector<4x64x64xf32>
    %45 = arith.subf %41, %44 : vector<4x64x64xf32>
    %46 = math.exp %45 : vector<4x64x64xf32>
    %cst_23 = arith.constant dense<0.000000e+00> : vector<4x64xf32>
    %47 = vector.multi_reduction <add>, %46, %cst_23 [2] : vector<4x64x64xf32> to vector<4x64xf32>
    %48 = vector.shape_cast %47 : vector<4x64xf32> to vector<4x64x1xf32>
    %49 = tpu.reciprocal %48 {approx = true} : vector<4x64x1xf32> -> vector<4x64x1xf32>
    %50 = vector.broadcast %49 : vector<4x64x1xf32> to vector<4x64x64xf32>
    %51 = arith.mulf %46, %50 : vector<4x64x64xf32>
    %cst_24 = arith.constant dense<0.000000e+00> : vector<4x8x64xf32>
    %52 = tpu.matmul %38, %51, %cst_24 {dimension_numbers = #tpu.dot_dimension_numbers<[2], [2], [1], [1], [0, 0, 0, 1, 1, 1], [0], [0]>} : vector<4x8x64xf32>, vector<4x64x64xf32>, vector<4x8x64xf32> -> vector<4x8x64xf32>
    %53 = vector.shape_cast %52 : vector<4x8x64xf32> to vector<32x64xf32>
    %c0_25 = arith.constant 0 : index
    %c0_26 = arith.constant 0 : index
    %54 = vector.load %arg7[%c0_25, %c0_26] : memref<32x8xf32, #tpu.memory_space<vmem>>, vector<32x8xf32>
    %c0_27 = arith.constant 0 : index
    %c0_28 = arith.constant 0 : index
    %55 = vector.load %arg8[%c0_27, %c0_28] : memref<32x1xf32, #tpu.memory_space<vmem>>, vector<32x1xf32>
    %cst_29 = arith.constant dense<0.000000e+00> : vector<32xf32>
    %56 = vector.multi_reduction <add>, %54, %cst_29 [1] : vector<32x8xf32> to vector<32xf32>
    %57 = vector.shape_cast %56 : vector<32xf32> to vector<32x1xf32>
    %58 = arith.mulf %54, %54 : vector<32x8xf32>
    %cst_30 = arith.constant dense<0.000000e+00> : vector<32xf32>
    %59 = vector.multi_reduction <add>, %58, %cst_30 [1] : vector<32x8xf32> to vector<32xf32>
    %60 = vector.shape_cast %59 : vector<32xf32> to vector<32x1xf32>
    %cst_31 = arith.constant dense<0.000000e+00> : vector<32xf32>
    %61 = vector.multi_reduction <add>, %53, %cst_31 [1] : vector<32x64xf32> to vector<32xf32>
    %62 = vector.shape_cast %61 : vector<32xf32> to vector<32x1xf32>
    %63 = arith.mulf %53, %53 : vector<32x64xf32>
    %cst_32 = arith.constant dense<0.000000e+00> : vector<32xf32>
    %64 = vector.multi_reduction <add>, %63, %cst_32 [1] : vector<32x64xf32> to vector<32xf32>
    %65 = vector.shape_cast %64 : vector<32xf32> to vector<32x1xf32>
    %66 = arith.mulf %62, %57 : vector<32x1xf32>
    %cst_33 = arith.constant 5.120000e+02 : f32
    %67 = vector.broadcast %cst_33 : f32 to vector<32x1xf32>
    %68 = arith.mulf %67, %55 : vector<32x1xf32>
    %69 = arith.addf %66, %68 : vector<32x1xf32>
    %70 = vector.shape_cast %69 : vector<32x1xf32> to vector<1x32x1xf32>
    %cst_34 = arith.constant dense<0.000000e+00> : vector<1xf32>
    %71 = vector.multi_reduction <add>, %70, %cst_34 [1, 2] : vector<1x32x1xf32> to vector<1xf32>
    %72 = vector.shape_cast %71 : vector<1xf32> to vector<1x1x1xf32>
    %73 = vector.extract %72[0, 0, 0] : f32 from vector<1x1x1xf32>
    %74 = arith.mulf %65, %60 : vector<32x1xf32>
    %cst_35 = arith.constant 2.000000e+00 : f32
    %75 = vector.broadcast %cst_35 : f32 to vector<32x1xf32>
    %76 = arith.mulf %75, %55 : vector<32x1xf32>
    %77 = arith.mulf %76, %62 : vector<32x1xf32>
    %78 = arith.mulf %77, %57 : vector<32x1xf32>
    %79 = arith.addf %74, %78 : vector<32x1xf32>
    %cst_36 = arith.constant 5.120000e+02 : f32
    %80 = vector.broadcast %cst_36 : f32 to vector<32x1xf32>
    %81 = arith.mulf %80, %55 : vector<32x1xf32>
    %82 = arith.mulf %81, %55 : vector<32x1xf32>
    %83 = arith.addf %79, %82 : vector<32x1xf32>
    %84 = vector.shape_cast %83 : vector<32x1xf32> to vector<1x32x1xf32>
    %cst_37 = arith.constant dense<0.000000e+00> : vector<1xf32>
    %85 = vector.multi_reduction <add>, %84, %cst_37 [1, 2] : vector<1x32x1xf32> to vector<1xf32>
    %86 = vector.shape_cast %85 : vector<1xf32> to vector<1x1x1xf32>
    %87 = vector.extract %86[0, 0, 0] : f32 from vector<1x1x1xf32>
    %cst_38 = arith.constant 1.638400e+04 : f32
    %88 = arith.divf %73, %cst_38 : f32
    %cst_39 = arith.constant 1.638400e+04 : f32
    %89 = arith.divf %87, %cst_39 : f32
    %90 = arith.mulf %88, %88 : f32
    %91 = arith.subf %89, %90 : f32
    %cst_40 = arith.constant 0.000000e+00 : f32
    %92 = arith.maximumf %91, %cst_40 : f32
    %cst_41 = arith.constant 9.99999974E-6 : f32
    %93 = arith.addf %92, %cst_41 : f32
    %94 = math.rsqrt %93 : f32
    %c0_42 = arith.constant 0 : index
    %c0_43 = arith.constant 0 : index
    %95 = vector.load %arg9[%c0_42, %c0_43] : memref<32x1xf32, #tpu.memory_space<vmem>>, vector<32x1xf32>
    %96 = vector.broadcast %94 : f32 to vector<32x1xf32>
    %97 = arith.mulf %95, %96 : vector<32x1xf32>
    %98 = vector.broadcast %88 : f32 to vector<32x1xf32>
    %99 = arith.subf %55, %98 : vector<32x1xf32>
    %100 = arith.mulf %99, %97 : vector<32x1xf32>
    %c0_44 = arith.constant 0 : index
    %c0_45 = arith.constant 0 : index
    %101 = vector.load %arg10[%c0_44, %c0_45] : memref<32x1xf32, #tpu.memory_space<vmem>>, vector<32x1xf32>
    %102 = arith.addf %100, %101 : vector<32x1xf32>
    %103 = vector.broadcast %97 : vector<32x1xf32> to vector<32x8xf32>
    %104 = arith.mulf %54, %103 : vector<32x8xf32>
    %105 = vector.extract_strided_slice %104 {offsets = [0, 0], sizes = [32, 1], strides = [1, 1]} : vector<32x8xf32> to vector<32x1xf32>
    %106 = vector.broadcast %105 : vector<32x1xf32> to vector<32x64xf32>
    %107 = arith.mulf %53, %106 : vector<32x64xf32>
    %108 = vector.broadcast %102 : vector<32x1xf32> to vector<32x64xf32>
    %109 = arith.addf %107, %108 : vector<32x64xf32>
    %110 = vector.extract_strided_slice %104 {offsets = [0, 1], sizes = [32, 1], strides = [1, 1]} : vector<32x8xf32> to vector<32x1xf32>
    %111 = vector.broadcast %110 : vector<32x1xf32> to vector<32x64xf32>
    %112 = arith.mulf %53, %111 : vector<32x64xf32>
    %113 = vector.broadcast %102 : vector<32x1xf32> to vector<32x64xf32>
    %114 = arith.addf %112, %113 : vector<32x64xf32>
    %115 = vector.extract_strided_slice %104 {offsets = [0, 2], sizes = [32, 1], strides = [1, 1]} : vector<32x8xf32> to vector<32x1xf32>
    %116 = vector.broadcast %115 : vector<32x1xf32> to vector<32x64xf32>
    %117 = arith.mulf %53, %116 : vector<32x64xf32>
    %118 = vector.broadcast %102 : vector<32x1xf32> to vector<32x64xf32>
    %119 = arith.addf %117, %118 : vector<32x64xf32>
    %120 = vector.extract_strided_slice %104 {offsets = [0, 3], sizes = [32, 1], strides = [1, 1]} : vector<32x8xf32> to vector<32x1xf32>
    %121 = vector.broadcast %120 : vector<32x1xf32> to vector<32x64xf32>
    %122 = arith.mulf %53, %121 : vector<32x64xf32>
    %123 = vector.broadcast %102 : vector<32x1xf32> to vector<32x64xf32>
    %124 = arith.addf %122, %123 : vector<32x64xf32>
    %125 = vector.extract_strided_slice %104 {offsets = [0, 4], sizes = [32, 1], strides = [1, 1]} : vector<32x8xf32> to vector<32x1xf32>
    %126 = vector.broadcast %125 : vector<32x1xf32> to vector<32x64xf32>
    %127 = arith.mulf %53, %126 : vector<32x64xf32>
    %128 = vector.broadcast %102 : vector<32x1xf32> to vector<32x64xf32>
    %129 = arith.addf %127, %128 : vector<32x64xf32>
    %130 = vector.extract_strided_slice %104 {offsets = [0, 5], sizes = [32, 1], strides = [1, 1]} : vector<32x8xf32> to vector<32x1xf32>
    %131 = vector.broadcast %130 : vector<32x1xf32> to vector<32x64xf32>
    %132 = arith.mulf %53, %131 : vector<32x64xf32>
    %133 = vector.broadcast %102 : vector<32x1xf32> to vector<32x64xf32>
    %134 = arith.addf %132, %133 : vector<32x64xf32>
    %135 = vector.extract_strided_slice %104 {offsets = [0, 6], sizes = [32, 1], strides = [1, 1]} : vector<32x8xf32> to vector<32x1xf32>
    %136 = vector.broadcast %135 : vector<32x1xf32> to vector<32x64xf32>
    %137 = arith.mulf %53, %136 : vector<32x64xf32>
    %138 = vector.broadcast %102 : vector<32x1xf32> to vector<32x64xf32>
    %139 = arith.addf %137, %138 : vector<32x64xf32>
    %140 = vector.extract_strided_slice %104 {offsets = [0, 7], sizes = [32, 1], strides = [1, 1]} : vector<32x8xf32> to vector<32x1xf32>
    %141 = vector.broadcast %140 : vector<32x1xf32> to vector<32x64xf32>
    %142 = arith.mulf %53, %141 : vector<32x64xf32>
    %143 = vector.broadcast %102 : vector<32x1xf32> to vector<32x64xf32>
    %144 = arith.addf %142, %143 : vector<32x64xf32>
    %145 = tpu.concatenate %109, %114, %119, %124, %129, %134, %139, %144 in 1 : vector<32x64xf32>, vector<32x64xf32>, vector<32x64xf32>, vector<32x64xf32>, vector<32x64xf32>, vector<32x64xf32>, vector<32x64xf32>, vector<32x64xf32> -> vector<32x512xf32>
    %c0_46 = arith.constant 0 : index
    %c0_47 = arith.constant 0 : index
    %c0_48 = arith.constant 0 : index
    %146 = vector.load %arg11[%c0_46, %c0_47, %c0_48] : memref<1x32x512xf32, #tpu.memory_space<vmem>>, vector<1x32x512xf32>
    %147 = vector.shape_cast %146 : vector<1x32x512xf32> to vector<32x512xf32>
    %148 = vector.shape_cast %145 : vector<32x512xf32> to vector<1x32x512xf32>
    tpu.vector_store %arg11[%c0_46, %c0_47, %c0_48], %148 {strides = array<i32>} : memref<1x32x512xf32, #tpu.memory_space<vmem>>, vector<1x32x512xf32>,
    return
  }
  func.func @transform_0(%arg0: i32) -> (i32, i32) {
    %c0_i32 = arith.constant 0 : i32
    %c0_i32_0 = arith.constant 0 : i32
    %c0_i32_1 = arith.constant 0 : i32
    return %c0_i32, %c0_i32_0 : i32, i32
  }
  func.func @transform_1(%arg0: i32) -> (i32, i32, i32) {
    %c0_i32 = arith.constant 0 : i32
    %c0_i32_0 = arith.constant 0 : i32
    %c0_i32_1 = arith.constant 0 : i32
    return %arg0, %c0_i32, %c0_i32_0 : i32, i32, i32
  }
  func.func @transform_2(%arg0: i32) -> (i32, i32) {
    %c0_i32 = arith.constant 0 : i32
    %c0_i32_0 = arith.constant 0 : i32
    %c0_i32_1 = arith.constant 0 : i32
    return %c0_i32, %c0_i32_0 : i32, i32
  }
  func.func @transform_3(%arg0: i32) -> (i32, i32) {
    %c0_i32 = arith.constant 0 : i32
    %c0_i32_0 = arith.constant 0 : i32
    %c0_i32_1 = arith.constant 0 : i32
    return %c0_i32, %c0_i32_0 : i32, i32
  }
  func.func @transform_4(%arg0: i32) -> (i32, i32) {
    %c0_i32 = arith.constant 0 : i32
    %c0_i32_0 = arith.constant 0 : i32
    %c0_i32_1 = arith.constant 0 : i32
    return %c0_i32, %c0_i32_0 : i32, i32
  }
  func.func @transform_5(%arg0: i32) -> (i32, i32) {
    %c0_i32 = arith.constant 0 : i32
    %c0_i32_0 = arith.constant 0 : i32
    %c0_i32_1 = arith.constant 0 : i32
    return %c0_i32, %c0_i32_0 : i32, i32
  }
  func.func @transform_6(%arg0: i32) -> (i32, i32) {
    %c0_i32 = arith.constant 0 : i32
    %c0_i32_0 = arith.constant 0 : i32
    %c0_i32_1 = arith.constant 0 : i32
    return %c0_i32, %c0_i32_0 : i32, i32
  }
  func.func @transform_7(%arg0: i32) -> (i32, i32) {
    %c0_i32 = arith.constant 0 : i32
    %c0_i32_0 = arith.constant 0 : i32
    %c0_i32_1 = arith.constant 0 : i32
    return %c0_i32, %c0_i32_0 : i32, i32
  }
  func.func @transform_8(%arg0: i32) -> (i32, i32) {
    %c0_i32 = arith.constant 0 : i32
    %c0_i32_0 = arith.constant 0 : i32
    %c0_i32_1 = arith.constant 0 : i32
    return %c0_i32, %c0_i32_0 : i32, i32
  }
  func.func @transform_9(%arg0: i32) -> (i32, i32) {
    %c0_i32 = arith.constant 0 : i32
    %c0_i32_0 = arith.constant 0 : i32
    %c0_i32_1 = arith.constant 0 : i32
    return %c0_i32, %c0_i32_0 : i32, i32
  }
  func.func @transform_10(%arg0: i32) -> (i32, i32, i32) {
    %c0_i32 = arith.constant 0 : i32
    %c0_i32_0 = arith.constant 0 : i32
    %c0_i32_1 = arith.constant 0 : i32
    return %arg0, %c0_i32, %c0_i32_0 : i32, i32, i32
  }
}

</mosaic_0001>

<llo_original>
// kernel: tpu_custom_call.1
$region0: #{tpu_custom_call.1}
  #allocation0 [shape = 'u32[]', space=smem, size = 0x4, offset = 0x4, fixed_abs, tag = 'smem constant byte address 0x4 - core index']
  #allocation1 [shape = 'u32[72,128]{1,0:T(1,128)}', space=vmem, size = 0x9000, scoped, tag = 'internal scratch']
  %s0 = inlined_call_operand.vmem [shape: f32[32,128], index: 0, kind: input, shape index: {}]
  %s1 = inlined_call_operand.vmem [shape: f32[2,32,64], index: 1, kind: input, shape index: {}]
  %s2 = inlined_call_operand.vmem [shape: f32[4,32], index: 2, kind: input, shape index: {}]
  %s3 = inlined_call_operand.vmem [shape: f32[4,1], index: 3, kind: input, shape index: {}]
  %s4 = inlined_call_operand.vmem [shape: f32[4,1], index: 4, kind: input, shape index: {}]
  %s5 = inlined_call_operand.vmem [shape: f32[96,4], index: 5, kind: input, shape index: {}]
  %s6 = inlined_call_operand.vmem [shape: f32[32,8], index: 6, kind: input, shape index: {}]
  %s7 = inlined_call_operand.vmem [shape: f32[32,1], index: 7, kind: input, shape index: {}]
  %s8 = inlined_call_operand.vmem [shape: f32[32,1], index: 8, kind: input, shape index: {}]
  %s9 = inlined_call_operand.vmem [shape: f32[32,1], index: 9, kind: input, shape index: {}]
  %s10 = inlined_call_operand.hbm [shape: f32[2,32,512], index: 10, kind: output, shape index: {}]
  %s11 = sld [smem:[#allocation0]]
  $region73: #{tpu_custom_call.1} parent=0
    _
  %s13 = ssub.s32 1, %s11
  %s14 = scalar_select 0, %s13, %s11
  $region1: #{tpu_custom_call.1} parent=0
    #allocation2 [shape = 'u8[131072]{0}', space=vmem, size = 0x20000, scoped, tag = 'output window, operand 0']
    #allocation3 [shape = 's32[2]{0}', space=sflag, size = 0x8, scoped, tag = 'scoped memory for tpu_custom_call.1']
    %15 = vsyncpa [#allocation3], 0
    %s16 = scalar_lea.sflag [#allocation3], 1
    %17 = vsyncpa %s16, 0
    loop: start=0, step=1, limit=4
    $region2: #{tpu_custom_call.1} parent=1 // loop_pre_header
      _
    $region3: #{tpu_custom_call.1} parent=1 // loop_header
      %s19 = sphi 0, %s23
      %p20 = scmp.ge.s32.totalorder %s19, 4
      %s27 = sphi 0, %s27
      %s29 = sphi 0, %s27
      %s30 = sphi 0, %s29
      %s44 = sphi 0, %s30
      %s50 = sphi 0, %s52
      %s53 = sphi 0, %s50
      %s54 = sphi 0, %s53
      %s70 = sphi 0, %s54
      %s74 = sphi 0, %s74
      %s76 = sphi 0, %s74
      %s77 = sphi 0, %s76
      %s91 = sphi 0, %s77
      %s95 = sphi 0, %s95
      %s97 = sphi 0, %s95
      %s98 = sphi 0, %s97
      %s112 = sphi 0, %s98
      %s116 = sphi 0, %s116
      %s118 = sphi 0, %s116
      %s119 = sphi 0, %s118
      %s133 = sphi 0, %s119
      %s137 = sphi 0, %s137
      %s139 = sphi 0, %s137
      %s140 = sphi 0, %s139
      %s154 = sphi 0, %s140
      %s158 = sphi 0, %s158
      %s160 = sphi 0, %s158
      %s161 = sphi 0, %s160
      %s175 = sphi 0, %s161
      %s179 = sphi 0, %s179
      %s181 = sphi 0, %s179
      %s182 = sphi 0, %s181
      %s196 = sphi 0, %s182
      %s200 = sphi 0, %s200
      %s202 = sphi 0, %s200
      %s203 = sphi 0, %s202
      %s217 = sphi 0, %s203
      %s221 = sphi 0, %s221
      %s223 = sphi 0, %s221
      %s224 = sphi 0, %s223
      %s238 = sphi 0, %s224
      %s244 = sphi 0, %s246
      %s247 = sphi 0, %s244
      %s248 = sphi 0, %s247
      %s264 = sphi 0, %s248
    $region4: #{tpu_custom_call.1} parent=1 // loop_header_branch
      %22 = sbr.rel (%p20) target = $region8
    $region5: #{tpu_custom_call.1} parent=1 // loop_body
      %s24 = ssub.s32 %s19, 1
      %s25 = ssub.s32 %s19, 2
      %s26 = sadd.s32 %s19, 1
      %s28 = sadd.s32 %s27, 1
      %p31 = scmp.eq.s32.totalorder %s19, 1
      %p32 = scmp.ne.s32.totalorder %s27, %s29
      %p33 = scmp.eq.s32.totalorder %s19, 0
      %p34 = por %p32, %p33
      %p35 = scmp.ne.s32.totalorder %s27, %s29
      %p36 = scmp.eq.s32.totalorder %s24, 1
      %p37 = por %p35, %p36
      %p38 = scmp.ne.s32.totalorder %s29, %s30
      %p39 = scmp.eq.s32.totalorder %s24, 0
      %p40 = por %p38, %p39
      %p41 = scmp.ne.s32.totalorder %s29, %s30
      %p42 = scmp.eq.s32.totalorder %s25, 1
      %p43 = por %p41, %p42
      %p45 = scmp.ne.s32.totalorder %s30, %s44
      %p46 = scmp.eq.s32.totalorder %s25, 0
      %p47 = por %p45, %p46
      %s48 = ssub.s32 %s19, %s26
      %p49 = scmp.eq.s32.totalorder %s48, 0
      %s51 = sadd.s32 %s50, 1
      %s52 = scalar_select %p49, %s50, %s51
      %p55 = pneg %p49
      %p56 = scmp.eq.s32.totalorder %s19, 1
      %p57 = por %p55, %p56
      %p58 = scmp.ne.s32.totalorder %s50, %s53
      %p59 = scmp.eq.s32.totalorder %s19, 0
      %p60 = por %p58, %p59
      %p61 = scmp.ne.s32.totalorder %s50, %s53
      %p62 = scmp.eq.s32.totalorder %s24, 1
      %p63 = por %p61, %p62
      %p64 = scmp.ne.s32.totalorder %s53, %s54
      %p65 = scmp.eq.s32.totalorder %s24, 0
      %p66 = por %p64, %p65
      %p67 = scmp.ne.s32.totalorder %s53, %s54
      %p68 = scmp.eq.s32.totalorder %s25, 1
      %p69 = por %p67, %p68
      %p71 = scmp.ne.s32.totalorder %s54, %s70
      %p72 = scmp.eq.s32.totalorder %s25, 0
      %p73 = por %p71, %p72
      %s75 = sadd.s32 %s74, 1
      %p78 = scmp.eq.s32.totalorder %s19, 1
      %p79 = scmp.ne.s32.totalorder %s74, %s76
      %p80 = scmp.eq.s32.totalorder %s19, 0
      %p81 = por %p79, %p80
      %p82 = scmp.ne.s32.totalorder %s74, %s76
      %p83 = scmp.eq.s32.totalorder %s24, 1
      %p84 = por %p82, %p83
      %p85 = scmp.ne.s32.totalorder %s76, %s77
      %p86 = scmp.eq.s32.totalorder %s24, 0
      %p87 = por %p85, %p86
      %p88 = scmp.ne.s32.totalorder %s76, %s77
      %p89 = scmp.eq.s32.totalorder %s25, 1
      %p90 = por %p88, %p89
      %p92 = scmp.ne.s32.totalorder %s77, %s91
      %p93 = scmp.eq.s32.totalorder %s25, 0
      %p94 = por %p92, %p93
      %s96 = sadd.s32 %s95, 1
      %p99 = scmp.eq.s32.totalorder %s19, 1
      %p100 = scmp.ne.s32.totalorder %s95, %s97
      %p101 = scmp.eq.s32.totalorder %s19, 0
      %p102 = por %p100, %p101
      %p103 = scmp.ne.s32.totalorder %s95, %s97
      %p104 = scmp.eq.s32.totalorder %s24, 1
      %p105 = por %p103, %p104
      %p106 = scmp.ne.s32.totalorder %s97, %s98
      %p107 = scmp.eq.s32.totalorder %s24, 0
      %p108 = por %p106, %p107
      %p109 = scmp.ne.s32.totalorder %s97, %s98
      %p110 = scmp.eq.s32.totalorder %s25, 1
      %p111 = por %p109, %p110
      %p113 = scmp.ne.s32.totalorder %s98, %s112
      %p114 = scmp.eq.s32.totalorder %s25, 0
      %p115 = por %p113, %p114
      %s117 = sadd.s32 %s116, 1
      %p120 = scmp.eq.s32.totalorder %s19, 1
      %p121 = scmp.ne.s32.totalorder %s116, %s118
      %p122 = scmp.eq.s32.totalorder %s19, 0
      %p123 = por %p121, %p122
      %p124 = scmp.ne.s32.totalorder %s116, %s118
      %p125 = scmp.eq.s32.totalorder %s24, 1
      %p126 = por %p124, %p125
      %p127 = scmp.ne.s32.totalorder %s118, %s119
      %p128 = scmp.eq.s32.totalorder %s24, 0
      %p129 = por %p127, %p128
      %p130 = scmp.ne.s32.totalorder %s118, %s119
      %p131 = scmp.eq.s32.totalorder %s25, 1
      %p132 = por %p130, %p131
      %p134 = scmp.ne.s32.totalorder %s119, %s133
      %p135 = scmp.eq.s32.totalorder %s25, 0
      %p136 = por %p134, %p135
      %s138 = sadd.s32 %s137, 1
      %p141 = scmp.eq.s32.totalorder %s19, 1
      %p142 = scmp.ne.s32.totalorder %s137, %s139
      %p143 = scmp.eq.s32.totalorder %s19, 0
      %p144 = por %p142, %p143
      %p145 = scmp.ne.s32.totalorder %s137, %s139
      %p146 = scmp.eq.s32.totalorder %s24, 1
      %p147 = por %p145, %p146
      %p148 = scmp.ne.s32.totalorder %s139, %s140
      %p149 = scmp.eq.s32.totalorder %s24, 0
      %p150 = por %p148, %p149
      %p151 = scmp.ne.s32.totalorder %s139, %s140
      %p152 = scmp.eq.s32.totalorder %s25, 1
      %p153 = por %p151, %p152
      %p155 = scmp.ne.s32.totalorder %s140, %s154
      %p156 = scmp.eq.s32.totalorder %s25, 0
      %p157 = por %p155, %p156
      %s159 = sadd.s32 %s158, 1
      %p162 = scmp.eq.s32.totalorder %s19, 1
      %p163 = scmp.ne.s32.totalorder %s158, %s160
      %p164 = scmp.eq.s32.totalorder %s19, 0
      %p165 = por %p163, %p164
      %p166 = scmp.ne.s32.totalorder %s158, %s160
      %p167 = scmp.eq.s32.totalorder %s24, 1
      %p168 = por %p166, %p167
      %p169 = scmp.ne.s32.totalorder %s160, %s161
      %p170 = scmp.eq.s32.totalorder %s24, 0
      %p171 = por %p169, %p170
      %p172 = scmp.ne.s32.totalorder %s160, %s161
      %p173 = scmp.eq.s32.totalorder %s25, 1
      %p174 = por %p172, %p173
      %p176 = scmp.ne.s32.totalorder %s161, %s175
      %p177 = scmp.eq.s32.totalorder %s25, 0
      %p178 = por %p176, %p177
      %s180 = sadd.s32 %s179, 1
      %p183 = scmp.eq.s32.totalorder %s19, 1
      %p184 = scmp.ne.s32.totalorder %s179, %s181
      %p185 = scmp.eq.s32.totalorder %s19, 0
      %p186 = por %p184, %p185
      %p187 = scmp.ne.s32.totalorder %s179, %s181
      %p188 = scmp.eq.s32.totalorder %s24, 1
      %p189 = por %p187, %p188
      %p190 = scmp.ne.s32.totalorder %s181, %s182
      %p191 = scmp.eq.s32.totalorder %s24, 0
      %p192 = por %p190, %p191
      %p193 = scmp.ne.s32.totalorder %s181, %s182
      %p194 = scmp.eq.s32.totalorder %s25, 1
      %p195 = por %p193, %p194
      %p197 = scmp.ne.s32.totalorder %s182, %s196
      %p198 = scmp.eq.s32.totalorder %s25, 0
      %p199 = por %p197, %p198
      %s201 = sadd.s32 %s200, 1
      %p204 = scmp.eq.s32.totalorder %s19, 1
      %p205 = scmp.ne.s32.totalorder %s200, %s202
      %p206 = scmp.eq.s32.totalorder %s19, 0
      %p207 = por %p205, %p206
      %p208 = scmp.ne.s32.totalorder %s200, %s202
      %p209 = scmp.eq.s32.totalorder %s24, 1
      %p210 = por %p208, %p209
      %p211 = scmp.ne.s32.totalorder %s202, %s203
      %p212 = scmp.eq.s32.totalorder %s24, 0
      %p213 = por %p211, %p212
      %p214 = scmp.ne.s32.totalorder %s202, %s203
      %p215 = scmp.eq.s32.totalorder %s25, 1
      %p216 = por %p214, %p215
      %p218 = scmp.ne.s32.totalorder %s203, %s217
      %p219 = scmp.eq.s32.totalorder %s25, 0
      %p220 = por %p218, %p219
      %s222 = sadd.s32 %s221, 1
      %p225 = scmp.eq.s32.totalorder %s19, 1
      %p226 = scmp.ne.s32.totalorder %s221, %s223
      %p227 = scmp.eq.s32.totalorder %s19, 0
      %p228 = por %p226, %p227
      %p229 = scmp.ne.s32.totalorder %s221, %s223
      %p230 = scmp.eq.s32.totalorder %s24, 1
      %p231 = por %p229, %p230
      %p232 = scmp.ne.s32.totalorder %s223, %s224
      %p233 = scmp.eq.s32.totalorder %s24, 0
      %p234 = por %p232, %p233
      %p235 = scmp.ne.s32.totalorder %s223, %s224
      %p236 = scmp.eq.s32.totalorder %s25, 1
      %p237 = por %p235, %p236
      %p239 = scmp.ne.s32.totalorder %s224, %s238
      %p240 = scmp.eq.s32.totalorder %s25, 0
      %p241 = por %p239, %p240
      %s242 = ssub.s32 %s19, %s26
      %p243 = scmp.eq.s32.totalorder %s242, 0
      %s245 = sadd.s32 %s244, 1
      %s246 = scalar_select %p243, %s244, %s245
      %p249 = pneg %p243
      %p250 = scmp.eq.s32.totalorder %s19, 1
      %p251 = por %p249, %p250
      %p252 = scmp.ne.s32.totalorder %s244, %s247
      %p253 = scmp.eq.s32.totalorder %s19, 0
      %p254 = por %p252, %p253
      %p255 = scmp.ne.s32.totalorder %s244, %s247
      %p256 = scmp.eq.s32.totalorder %s24, 1
      %p257 = por %p255, %p256
      %p258 = scmp.ne.s32.totalorder %s247, %s248
      %p259 = scmp.eq.s32.totalorder %s24, 0
      %p260 = por %p258, %p259
      %p261 = scmp.ne.s32.totalorder %s247, %s248
      %p262 = scmp.eq.s32.totalorder %s25, 1
      %p263 = por %p261, %p262
      %p265 = scmp.ne.s32.totalorder %s248, %s264
      %p266 = scmp.eq.s32.totalorder %s25, 0
      %p267 = por %p265, %p266
      %p268 = scmp.le.s32.totalorder 1, %s19
      %p269 = scmp.lt.s32.totalorder %s19, 3
      %p270 = pnand %p268, %p269
      %p271 = pneg %p270
      // Predicated region
      $region9: #{tpu_custom_call.1} parent=5 // pred_check
        _
      $region10: #{tpu_custom_call.1} parent=5 // pred_check_branch
        %273 = sbr.rel (%p270) target = $region12
      $region11: #{tpu_custom_call.1} parent=5 // pred_region
        %s274 = ssub.s32 %s19, 1
        // Predicated region
        $region13: #{tpu_custom_call.1} parent=11 // pred_check
          %p275 = pneg %p40
        $region14: #{tpu_custom_call.1} parent=11 // pred_check_branch
          %277 = sbr.rel (%p275) target = $region16
        $region15: #{tpu_custom_call.1} parent=11 // pred_region
          _
        $region16: #{tpu_custom_call.1} parent=11 // pred_fallthru
          _
        // Predicated region
        $region17: #{tpu_custom_call.1} parent=11 // pred_check
          %p278 = pneg %p87
        $region18: #{tpu_custom_call.1} parent=11 // pred_check_branch
          %280 = sbr.rel (%p278) target = $region20
        $region19: #{tpu_custom_call.1} parent=11 // pred_region
          _
        $region20: #{tpu_custom_call.1} parent=11 // pred_fallthru
          _
        // Predicated region
        $region21: #{tpu_custom_call.1} parent=11 // pred_check
          %p281 = pneg %p108
        $region22: #{tpu_custom_call.1} parent=11 // pred_check_branch
          %283 = sbr.rel (%p281) target = $region24
        $region23: #{tpu_custom_call.1} parent=11 // pred_region
          _
        $region24: #{tpu_custom_call.1} parent=11 // pred_fallthru
          _
        // Predicated region
        $region25: #{tpu_custom_call.1} parent=11 // pred_check
          %p284 = pneg %p129
        $region26: #{tpu_custom_call.1} parent=11 // pred_check_branch
          %286 = sbr.rel (%p284) target = $region28
        $region27: #{tpu_custom_call.1} parent=11 // pred_region
          _
        $region28: #{tpu_custom_call.1} parent=11 // pred_fallthru
          _
        // Predicated region
        $region29: #{tpu_custom_call.1} parent=11 // pred_check
          %p287 = pneg %p150
        $region30: #{tpu_custom_call.1} parent=11 // pred_check_branch
          %289 = sbr.rel (%p287) target = $region32
        $region31: #{tpu_custom_call.1} parent=11 // pred_region
          _
        $region32: #{tpu_custom_call.1} parent=11 // pred_fallthru
          _
        // Predicated region
        $region33: #{tpu_custom_call.1} parent=11 // pred_check
          %p290 = pneg %p171
        $region34: #{tpu_custom_call.1} parent=11 // pred_check_branch
          %292 = sbr.rel (%p290) target = $region36
        $region35: #{tpu_custom_call.1} parent=11 // pred_region
          _
        $region36: #{tpu_custom_call.1} parent=11 // pred_fallthru
          _
        // Predicated region
        $region37: #{tpu_custom_call.1} parent=11 // pred_check
          %p293 = pneg %p192
        $region38: #{tpu_custom_call.1} parent=11 // pred_check_branch
          %295 = sbr.rel (%p293) target = $region40
        $region39: #{tpu_custom_call.1} parent=11 // pred_region
          _
        $region40: #{tpu_custom_call.1} parent=11 // pred_fallthru
          _
        // Predicated region
        $region41: #{tpu_custom_call.1} parent=11 // pred_check
          %p296 = pneg %p213
        $region42: #{tpu_custom_call.1} parent=11 // pred_check_branch
          %298 = sbr.rel (%p296) target = $region44
        $region43: #{tpu_custom_call.1} parent=11 // pred_region
          _
        $region44: #{tpu_custom_call.1} parent=11 // pred_fallthru
          _
        // Predicated region
        $region45: #{tpu_custom_call.1} parent=11 // pred_check
          %p299 = pneg %p234
        $region46: #{tpu_custom_call.1} parent=11 // pred_check_branch
          %301 = sbr.rel (%p299) target = $region48
        $region47: #{tpu_custom_call.1} parent=11 // pred_region
          _
        $region48: #{tpu_custom_call.1} parent=11 // pred_fallthru
          _
      $region12: #{tpu_custom_call.1} parent=5 // pred_fallthru
        _
      %p302 = scmp.lt.s32.totalorder %s19, 2
      // Predicated region
      $region49: #{tpu_custom_call.1} parent=5 // pred_check
        %p303 = pneg %p302
      $region50: #{tpu_custom_call.1} parent=5 // pred_check_branch
        %305 = sbr.rel (%p303) target = $region52
      $region51: #{tpu_custom_call.1} parent=5 // pred_region
        // Predicated region
        $region53: #{tpu_custom_call.1} parent=51 // pred_check
          %p306 = pneg %p60
        $region54: #{tpu_custom_call.1} parent=51 // pred_check_branch
          %308 = sbr.rel (%p306) target = $region56
        $region55: #{tpu_custom_call.1} parent=51 // pred_region
          %p309 = scmp.lt.s32.totalorder %s19, 1
          %s310 = scalar_select %p309, %s19, 1
          %s311 = smul.addr %s310, 4
          %s312 = smul.addr %s311, 8
          %s313 = scalar_lea.vmem %s1, %s312
        $region56: #{tpu_custom_call.1} parent=51 // pred_fallthru
          _
      $region52: #{tpu_custom_call.1} parent=5 // pred_fallthru
        _
      %p314 = scmp.le.s32.totalorder 1, %s19
      %p315 = scmp.lt.s32.totalorder %s19, 3
      %p316 = pnand %p314, %p315
      %p317 = pneg %p316
      // Predicated region
      $region57: #{tpu_custom_call.1} parent=5 // pred_check
        _
      $region58: #{tpu_custom_call.1} parent=5 // pred_check_branch
        %319 = sbr.rel (%p316) target = $region60
      $region59: #{tpu_custom_call.1} parent=5 // pred_region
        %s320 = ssub.s32 %s19, 1
        %p321 = pneg %p40
        %p322 = pneg %p37
        %p323 = scmp.lt.s32.totalorder %s24, 1
        %s324 = scalar_select %p323, %s24, 1
        %s325 = smul.addr %s324, 4
        %s326 = smul.addr %s325, 8
        %s327 = scalar_lea.vmem %s1, %s326
        %p328 = pneg %p66
        %p329 = pneg %p63
        %p330 = pneg %p87
        %p331 = pneg %p84
        %p332 = pneg %p108
        %p333 = pneg %p105
        %p334 = pneg %p129
        %p335 = pneg %p126
        %p336 = pneg %p150
        %p337 = pneg %p147
        %p338 = pneg %p171
        %p339 = pneg %p168
        %p340 = pneg %p192
        %p341 = pneg %p189
        %p342 = pneg %p213
        %p343 = pneg %p210
        %p344 = pneg %p234
        %p345 = pneg %p231
        %p346 = pneg %p260
        %p347 = pneg %p257
        %s348 = sand.u32 %s247, 1
        %s349 = scalar_lea.sflag [#allocation3], %s348
        %s350 = sand.u32 %s247, 1
        %s351 = smul.addr %s350, 128
        %s352 = scalar_lea.vmem [#allocation2], %s351
        %p353 = scmp.lt.s32.totalorder %s24, 1
        %s354 = scalar_select %p353, %s24, 1
        %s355 = smul.addr %s354, 4
        %s356 = smul.addr %s355, 8
        %s357 = scalar_lea.vmem %s1, %s356
        %v358 = vld [vmem:[%s2] sm:$0xf]
        %v359 = vld [vmem:[%s0] sm:$0xff]
        %v360 = vld [vmem:[%s0 + $0x8] sm:$0xff]
        %v361 = vld [vmem:[%s0 + $0x10] sm:$0xff]
        %v362 = vld [vmem:[%s0 + $0x18] sm:$0xff]
        %vm363 = vcmask 261120
        %v365 = vsel %vm363, %v358, 0
        %367 = vmatpush.msra.mxu0 0.0
        %368 = vmatpush.msra.mxu0 0.0
        %369 = vmatpush.msra.mxu0 0.0
        %370 = vmatpush.msra.mxu0 0.0
        %371 = vmatpush.msra.mxu0 0.0
        %372 = vmatpush.msra.mxu0 0.0
        %373 = vmatpush.msra.mxu0 0.0
        %374 = vmatpush.msra.mxu0 0.0
        %375 = vmatpush.msra.mxu0 0.0
        %376 = vmatpush.msra.mxu0 0.0
        %377 = vmatpush.msra.mxu0 0.0
        %378 = vmatpush.msra.mxu0 0.0
        %379 = vmatpush.msra.mxu0 %v362
        %380 = vmatpush.msra.mxu0 %v361
        %381 = vmatpush.msra.mxu0 %v360
        %382 = vmatpush.msra.mxu0 %v359
        %383 = vmatmul.f32.gmra.mxu0 %v365
        %v384 = vpop.f32.mrf.mxu0
        %v385 = vadd.f32 0.0, %v384
        %386 = vdwg.mxu0
        %vm387 = vcmask 1043456
        %v388 = vsel %vm387, %v385, 0.0
        %389 = vadd.xlane.f32.xlu0 %v388
        %v390 = vpop.xlane.xlu0 %389
        %v391 = vmul.f32 %v390, 0.0078125
        %v392 = vmul.f32 %v385, %v385
        %v393 = vsel %vm387, %v392, 0.0
        %394 = vadd.xlane.f32.xlu0 %v393
        %v395 = vpop.xlane.xlu0 %394
        %v396 = vmul.f32 %v395, 0.0078125
        %v397 = vmul.f32 %v391, %v391
        %v398 = vsub.f32 %v396, %v397
        %v399 = vmax.f32 %v398, 0.0
        %v400 = vadd.f32 %v399, 1e-05
        %v401 = vrsqrt.pop %v400
        %v402 = vmul.f32 %v401, %v400
        %v403 = vmul.f32 %v402, %v401
        %v404 = vmul.f32 0.5, %v403
        %v405 = vsub.f32 1.5, %v404
        %v406 = vmul.f32 %v401, %v405
        %vm407 = vweird.f32 %v400
        %vm408 = vweird.f32 %v401
        %vm409 = vmor %vm407, %vm408
        %v410 = vsel %vm409, %v401, %v406
        %v411 = vld [vmem:[%s357] sm:$0xff]
        %v412 = vld [vmem:[%s357 + $0x8] sm:$0xff]
        %v413 = vld [vmem:[%s357 + $0x10] sm:$0xff]
        %v414 = vld [vmem:[%s357 + $0x18] sm:$0xff]
        %415 = vmatpush.msra.mxu0 0.0
        %416 = vmatpush.msra.mxu0 0.0
        %417 = vmatpush.msra.mxu0 0.0
        %418 = vmatpush.msra.mxu0 0.0
        %419 = vmatpush.msra.mxu0 0.0
        %420 = vmatpush.msra.mxu0 0.0
        %421 = vmatpush.msra.mxu0 0.0
        %422 = vmatpush.msra.mxu0 0.0
        %423 = vmatpush.msra.mxu0 0.0
        %424 = vmatpush.msra.mxu0 0.0
        %425 = vmatpush.msra.mxu0 0.0
        %426 = vmatpush.msra.mxu0 0.0
        %427 = vmatpush.msra.mxu0 %v414
        %428 = vmatpush.msra.mxu0 %v413
        %429 = vmatpush.msra.mxu0 %v412
        %430 = vmatpush.msra.mxu0 %v411
        %431 = vmatmul.f32.gmra.mxu0 %v365
        %v432 = vpop.f32.mrf.mxu0
        %v433 = vadd.f32 0.0, %v432
        %434 = vdwg.mxu0
        %v435 = vsub.f32 %v433, %v391
        %v436 = vld [vmem:[%s3] sm:$0xf]
        %v437 = vmul.f32 %v410, %v436
        %439 = vset.pattern.permute.xlu0 0
        %440 = vperm.xlu0 %439, %v437
        %v441 = vpop.permute.xlu0 %440
        %v443 = vmul.f32 %v435, %v441
        %v444 = vld [vmem:[%s4] sm:$0xf]
        %446 = vset.pattern.permute.xlu0 0
        %447 = vperm.xlu0 %446, %v444
        %v448 = vpop.permute.xlu0 %447
        %v450 = vadd.f32 %v443, %v448
        %v451 = vld [vmem:[%s5] sm:$0xff]
        %v452 = vld [vmem:[%s5 + $0x8] sm:$0xff]
        %v453 = vld [vmem:[%s5 + $0x10] sm:$0xff]
        %v454 = vld [vmem:[%s5 + $0x18] sm:$0xff]
        %v455 = vld [vmem:[%s5 + $0x20] sm:$0xff]
        %v456 = vld [vmem:[%s5 + $0x28] sm:$0xff]
        %v457 = vld [vmem:[%s5 + $0x30] sm:$0xff]
        %v458 = vld [vmem:[%s5 + $0x38] sm:$0xff]
        %v459 = vld [vmem:[%s5 + $0x40] sm:$0xff]
        %v460 = vld [vmem:[%s5 + $0x48] sm:$0xff]
        %v461 = vld [vmem:[%s5 + $0x50] sm:$0xff]
        %v462 = vld [vmem:[%s5 + $0x58] sm:$0xff]
        %vm463 = vcmask 31744
        %v465 = vsel %vm463, %v451, 0
        %v468 = vsel %vm463, %v452, 0
        %v471 = vsel %vm463, %v453, 0
        %v474 = vsel %vm463, %v454, 0
        %v477 = vsel %vm463, %v455, 0
        %v480 = vsel %vm463, %v456, 0
        %v483 = vsel %vm463, %v457, 0
        %v486 = vsel %vm463, %v458, 0
        %v489 = vsel %vm463, %v459, 0
        %v492 = vsel %vm463, %v460, 0
        %v495 = vsel %vm463, %v461, 0
        %v498 = vsel %vm463, %v462, 0
        %v501 = vsel %vm387, %v450, 0
        %503 = vmatpush.msra.mxu0 0.0
        %504 = vmatpush.msra.mxu0 0.0
        %505 = vmatpush.msra.mxu0 0.0
        %506 = vmatpush.msra.mxu0 0.0
        %507 = vmatpush.msra.mxu0 0.0
        %508 = vmatpush.msra.mxu0 0.0
        %509 = vmatpush.msra.mxu0 0.0
        %510 = vmatpush.msra.mxu0 0.0
        %511 = vmatpush.msra.mxu0 0.0
        %512 = vmatpush.msra.mxu0 0.0
        %513 = vmatpush.msra.mxu0 0.0
        %514 = vmatpush.msra.mxu0 0.0
        %515 = vmatpush.msra.mxu0 0.0
        %516 = vmatpush.msra.mxu0 0.0
        %517 = vmatpush.msra.mxu0 0.0
        %518 = vmatpush.msra.mxu0 %v501
        %519 = vmatmul.f32.gmra.mxu0 %v465
        %v520 = vpop.f32.mrf.mxu0
        %v521 = vadd.f32 0.0, %v520
        %522 = vmatmul.f32.gmra.mxu0 %v468
        %v523 = vpop.f32.mrf.mxu0
        %v524 = vadd.f32 0.0, %v523
        %525 = vmatmul.f32.gmra.mxu0 %v471
        %v526 = vpop.f32.mrf.mxu0
        %v527 = vadd.f32 0.0, %v526
        %528 = vmatmul.f32.gmra.mxu0 %v474
        %v529 = vpop.f32.mrf.mxu0
        %v530 = vadd.f32 0.0, %v529
        %531 = vmatmul.f32.gmra.mxu0 %v477
        %v532 = vpop.f32.mrf.mxu0
        %v533 = vadd.f32 0.0, %v532
        %534 = vmatmul.f32.gmra.mxu0 %v480
        %v535 = vpop.f32.mrf.mxu0
        %v536 = vadd.f32 0.0, %v535
        %537 = vmatmul.f32.gmra.mxu0 %v483
        %v538 = vpop.f32.mrf.mxu0
        %v539 = vadd.f32 0.0, %v538
        %540 = vmatmul.f32.gmra.mxu0 %v486
        %v541 = vpop.f32.mrf.mxu0
        %v542 = vadd.f32 0.0, %v541
        %543 = vmatmul.f32.gmra.mxu0 %v489
        %v544 = vpop.f32.mrf.mxu0
        %v545 = vadd.f32 0.0, %v544
        %546 = vmatmul.f32.gmra.mxu0 %v492
        %v547 = vpop.f32.mrf.mxu0
        %v548 = vadd.f32 0.0, %v547
        %549 = vmatmul.f32.gmra.mxu0 %v495
        %v550 = vpop.f32.mrf.mxu0
        %v551 = vadd.f32 0.0, %v550
        %552 = vmatmul.f32.gmra.mxu0 %v498
        %v553 = vpop.f32.mrf.mxu0
        %v554 = vadd.f32 0.0, %v553
        %555 = vdwg.mxu0
        %v556 = vmul.f32 %v521, 0.35355338
        %v557 = vmul.f32 %v524, 0.35355338
        %v558 = vmul.f32 %v527, 0.35355338
        %v559 = vmul.f32 %v530, 0.35355338
        %560 = vxpose.xlu0.b32.start [1/16] %v556, 128
        %561 = vxpose.xlu0.b32.cont [2/16] 0.0, 128
        %562 = vxpose.xlu0.b32.cont [3/16] 0.0, 128
        %563 = vxpose.xlu0.b32.cont [4/16] 0.0, 128
        %564 = vxpose.xlu0.b32.cont [5/16] 0.0, 128
        %565 = vxpose.xlu0.b32.cont [6/16] 0.0, 128
        %566 = vxpose.xlu0.b32.cont [7/16] 0.0, 128
        %567 = vxpose.xlu0.b32.cont [8/16] 0.0, 128
        %568 = vxpose.xlu0.b32.cont [9/16] 0.0, 128
        %569 = vxpose.xlu0.b32.cont [10/16] 0.0, 128
        %570 = vxpose.xlu0.b32.cont [11/16] 0.0, 128
        %571 = vxpose.xlu0.b32.cont [12/16] 0.0, 128
        %572 = vxpose.xlu0.b32.cont [13/16] 0.0, 128
        %573 = vxpose.xlu0.b32.cont [14/16] 0.0, 128
        %574 = vxpose.xlu0.b32.cont [15/16] 0.0, 128
        %575 = vxpose.xlu0.b32.end [16/16] 0.0, 128
        %v576 = vpop.trf.xlu0
        %v577 = vpop.trf.xlu0
        %v578 = vpop.trf.xlu0
        %v579 = vpop.trf.xlu0
        %v580 = vpop.trf.xlu0
        %v581 = vpop.trf.xlu0
        %v582 = vpop.trf.xlu0
        %v583 = vpop.trf.xlu0
        %v584 = vpop.trf.xlu0
        %v585 = vpop.trf.xlu0
        %v586 = vpop.trf.xlu0
        %v587 = vpop.trf.xlu0
        %v588 = vpop.trf.xlu0
        %v589 = vpop.trf.xlu0
        %v590 = vpop.trf.xlu0
        %v591 = vpop.trf.xlu0
        %vm592 = vcmask 64512
        %v594 = vsel %vm592, %v576, 0
        %v597 = vsel %vm592, %v577, 0
        %v600 = vsel %vm592, %v578, 0
        %v603 = vsel %vm592, %v579, 0
        %v606 = vsel %vm592, %v580, 0
        %v609 = vsel %vm592, %v581, 0
        %v612 = vsel %vm592, %v582, 0
        %v615 = vsel %vm592, %v583, 0
        %617 = vmatpush.msra.mxu0 0.0
        %618 = vmatpush.msra.mxu0 0.0
        %619 = vmatpush.msra.mxu0 0.0
        %620 = vmatpush.msra.mxu0 0.0
        %621 = vmatpush.msra.mxu0 0.0
        %622 = vmatpush.msra.mxu0 0.0
        %623 = vmatpush.msra.mxu0 0.0
        %624 = vmatpush.msra.mxu0 0.0
        %625 = vmatpush.msra.mxu0 0.0
        %626 = vmatpush.msra.mxu0 0.0
        %627 = vmatpush.msra.mxu0 0.0
        %628 = vmatpush.msra.mxu0 0.0
        %629 = vmatpush.msra.mxu0 0.0
        %630 = vmatpush.msra.mxu0 0.0
        %631 = vmatpush.msra.mxu0 0.0
        %632 = vmatpush.msra.mxu0 %v533
        %633 = vmatmul.f32.gmra.mxu0 %v594
        %v634 = vpop.f32.mrf.mxu0
        %v635 = vadd.f32 0.0, %v634
        %636 = vmatmul.f32.gmra.mxu0 %v597
        %v637 = vpop.f32.mrf.mxu0
        %v638 = vadd.f32 0.0, %v637
        %639 = vmatmul.f32.gmra.mxu0 %v600
        %v640 = vpop.f32.mrf.mxu0
        %v641 = vadd.f32 0.0, %v640
        %642 = vmatmul.f32.gmra.mxu0 %v603
        %v643 = vpop.f32.mrf.mxu0
        %v644 = vadd.f32 0.0, %v643
        %645 = vmatmul.f32.gmra.mxu0 %v606
        %v646 = vpop.f32.mrf.mxu0
        %v647 = vadd.f32 0.0, %v646
        %648 = vmatmul.f32.gmra.mxu0 %v609
        %v649 = vpop.f32.mrf.mxu0
        %v650 = vadd.f32 0.0, %v649
        %651 = vmatmul.f32.gmra.mxu0 %v612
        %v652 = vpop.f32.mrf.mxu0
        %v653 = vadd.f32 0.0, %v652
        %654 = vmatmul.f32.gmra.mxu0 %v615
        %v655 = vpop.f32.mrf.mxu0
        %v656 = vadd.f32 0.0, %v655
        %657 = vdwg.mxu0
        %658 = vxpose.xlu0.b32.start [1/16] %v557, 128
        %659 = vxpose.xlu0.b32.cont [2/16] 0.0, 128
        %660 = vxpose.xlu0.b32.cont [3/16] 0.0, 128
        %661 = vxpose.xlu0.b32.cont [4/16] 0.0, 128
        %662 = vxpose.xlu0.b32.cont [5/16] 0.0, 128
        %663 = vxpose.xlu0.b32.cont [6/16] 0.0, 128
        %664 = vxpose.xlu0.b32.cont [7/16] 0.0, 128
        %665 = vxpose.xlu0.b32.cont [8/16] 0.0, 128
        %666 = vxpose.xlu0.b32.cont [9/16] 0.0, 128
        %667 = vxpose.xlu0.b32.cont [10/16] 0.0, 128
        %668 = vxpose.xlu0.b32.cont [11/16] 0.0, 128
        %669 = vxpose.xlu0.b32.cont [12/16] 0.0, 128
        %670 = vxpose.xlu0.b32.cont [13/16] 0.0, 128
        %671 = vxpose.xlu0.b32.cont [14/16] 0.0, 128
        %672 = vxpose.xlu0.b32.cont [15/16] 0.0, 128
        %673 = vxpose.xlu0.b32.end [16/16] 0.0, 128
        %v674 = vpop.trf.xlu0
        %v675 = vpop.trf.xlu0
        %v676 = vpop.trf.xlu0
        %v677 = vpop.trf.xlu0
        %v678 = vpop.trf.xlu0
        %v679 = vpop.trf.xlu0
        %v680 = vpop.trf.xlu0
        %v681 = vpop.trf.xlu0
        %v682 = vpop.trf.xlu0
        %v683 = vpop.trf.xlu0
        %v684 = vpop.trf.xlu0
        %v685 = vpop.trf.xlu0
        %v686 = vpop.trf.xlu0
        %v687 = vpop.trf.xlu0
        %v688 = vpop.trf.xlu0
        %v689 = vpop.trf.xlu0
        %v691 = vsel %vm592, %v674, 0
        %v694 = vsel %vm592, %v675, 0
        %v697 = vsel %vm592, %v676, 0
        %v700 = vsel %vm592, %v677, 0
        %v703 = vsel %vm592, %v678, 0
        %v706 = vsel %vm592, %v679, 0
        %v709 = vsel %vm592, %v680, 0
        %v712 = vsel %vm592, %v681, 0
        %714 = vmatpush.msra.mxu0 0.0
        %715 = vmatpush.msra.mxu0 0.0
        %716 = vmatpush.msra.mxu0 0.0
        %717 = vmatpush.msra.mxu0 0.0
        %718 = vmatpush.msra.mxu0 0.0
        %719 = vmatpush.msra.mxu0 0.0
        %720 = vmatpush.msra.mxu0 0.0
        %721 = vmatpush.msra.mxu0 0.0
        %722 = vmatpush.msra.mxu0 0.0
        %723 = vmatpush.msra.mxu0 0.0
        %724 = vmatpush.msra.mxu0 0.0
        %725 = vmatpush.msra.mxu0 0.0
        %726 = vmatpush.msra.mxu0 0.0
        %727 = vmatpush.msra.mxu0 0.0
        %728 = vmatpush.msra.mxu0 0.0
        %729 = vmatpush.msra.mxu0 %v536
        %730 = vmatmul.f32.gmra.mxu0 %v691
        %v731 = vpop.f32.mrf.mxu0
        %v732 = vadd.f32 0.0, %v731
        %733 = vmatmul.f32.gmra.mxu0 %v694
        %v734 = vpop.f32.mrf.mxu0
        %v735 = vadd.f32 0.0, %v734
        %736 = vmatmul.f32.gmra.mxu0 %v697
        %v737 = vpop.f32.mrf.mxu0
        %v738 = vadd.f32 0.0, %v737
        %739 = vmatmul.f32.gmra.mxu0 %v700
        %v740 = vpop.f32.mrf.mxu0
        %v741 = vadd.f32 0.0, %v740
        %742 = vmatmul.f32.gmra.mxu0 %v703
        %v743 = vpop.f32.mrf.mxu0
        %v744 = vadd.f32 0.0, %v743
        %745 = vmatmul.f32.gmra.mxu0 %v706
        %v746 = vpop.f32.mrf.mxu0
        %v747 = vadd.f32 0.0, %v746
        %748 = vmatmul.f32.gmra.mxu0 %v709
        %v749 = vpop.f32.mrf.mxu0
        %v750 = vadd.f32 0.0, %v749
        %751 = vmatmul.f32.gmra.mxu0 %v712
        %v752 = vpop.f32.mrf.mxu0
        %v753 = vadd.f32 0.0, %v752
        %754 = vdwg.mxu0
        %755 = vxpose.xlu0.b32.start [1/16] %v558, 128
        %756 = vxpose.xlu0.b32.cont [2/16] 0.0, 128
        %757 = vxpose.xlu0.b32.cont [3/16] 0.0, 128
        %758 = vxpose.xlu0.b32.cont [4/16] 0.0, 128
        %759 = vxpose.xlu0.b32.cont [5/16] 0.0, 128
        %760 = vxpose.xlu0.b32.cont [6/16] 0.0, 128
        %761 = vxpose.xlu0.b32.cont [7/16] 0.0, 128
        %762 = vxpose.xlu0.b32.cont [8/16] 0.0, 128
        %763 = vxpose.xlu0.b32.cont [9/16] 0.0, 128
        %764 = vxpose.xlu0.b32.cont [10/16] 0.0, 128
        %765 = vxpose.xlu0.b32.cont [11/16] 0.0, 128
        %766 = vxpose.xlu0.b32.cont [12/16] 0.0, 128
        %767 = vxpose.xlu0.b32.cont [13/16] 0.0, 128
        %768 = vxpose.xlu0.b32.cont [14/16] 0.0, 128
        %769 = vxpose.xlu0.b32.cont [15/16] 0.0, 128
        %770 = vxpose.xlu0.b32.end [16/16] 0.0, 128
        %v771 = vpop.trf.xlu0
        %v772 = vpop.trf.xlu0
        %v773 = vpop.trf.xlu0
        %v774 = vpop.trf.xlu0
        %v775 = vpop.trf.xlu0
        %v776 = vpop.trf.xlu0
        %v777 = vpop.trf.xlu0
        %v778 = vpop.trf.xlu0
        %v779 = vpop.trf.xlu0
        %v780 = vpop.trf.xlu0
        %v781 = vpop.trf.xlu0
        %v782 = vpop.trf.xlu0
        %v783 = vpop.trf.xlu0
        %v784 = vpop.trf.xlu0
        %v785 = vpop.trf.xlu0
        %v786 = vpop.trf.xlu0
        %v788 = vsel %vm592, %v771, 0
        %v791 = vsel %vm592, %v772, 0
        %v794 = vsel %vm592, %v773, 0
        %v797 = vsel %vm592, %v774, 0
        %v800 = vsel %vm592, %v775, 0
        %v803 = vsel %vm592, %v776, 0
        %v806 = vsel %vm592, %v777, 0
        %v809 = vsel %vm592, %v778, 0
        %811 = vmatpush.msra.mxu0 0.0
        %812 = vmatpush.msra.mxu0 0.0
        %813 = vmatpush.msra.mxu0 0.0
        %814 = vmatpush.msra.mxu0 0.0
        %815 = vmatpush.msra.mxu0 0.0
        %816 = vmatpush.msra.mxu0 0.0
        %817 = vmatpush.msra.mxu0 0.0
        %818 = vmatpush.msra.mxu0 0.0
        %819 = vmatpush.msra.mxu0 0.0
        %820 = vmatpush.msra.mxu0 0.0
        %821 = vmatpush.msra.mxu0 0.0
        %822 = vmatpush.msra.mxu0 0.0
        %823 = vmatpush.msra.mxu0 0.0
        %824 = vmatpush.msra.mxu0 0.0
        %825 = vmatpush.msra.mxu0 0.0
        %826 = vmatpush.msra.mxu0 %v539
        %827 = vmatmul.f32.gmra.mxu0 %v788
        %v828 = vpop.f32.mrf.mxu0
        %v829 = vadd.f32 0.0, %v828
        %830 = vmatmul.f32.gmra.mxu0 %v791
        %v831 = vpop.f32.mrf.mxu0
        %v832 = vadd.f32 0.0, %v831
        %833 = vmatmul.f32.gmra.mxu0 %v794
        %v834 = vpop.f32.mrf.mxu0
        %v835 = vadd.f32 0.0, %v834
        %836 = vmatmul.f32.gmra.mxu0 %v797
        %v837 = vpop.f32.mrf.mxu0
        %v838 = vadd.f32 0.0, %v837
        %839 = vmatmul.f32.gmra.mxu0 %v800
        %v840 = vpop.f32.mrf.mxu0
        %v841 = vadd.f32 0.0, %v840
        %842 = vmatmul.f32.gmra.mxu0 %v803
        %v843 = vpop.f32.mrf.mxu0
        %v844 = vadd.f32 0.0, %v843
        %845 = vmatmul.f32.gmra.mxu0 %v806
        %v846 = vpop.f32.mrf.mxu0
        %v847 = vadd.f32 0.0, %v846
        %848 = vmatmul.f32.gmra.mxu0 %v809
        %v849 = vpop.f32.mrf.mxu0
        %v850 = vadd.f32 0.0, %v849
        %851 = vdwg.mxu0
        %852 = vxpose.xlu0.b32.start [1/16] %v559, 128
        %853 = vxpose.xlu0.b32.cont [2/16] 0.0, 128
        %854 = vxpose.xlu0.b32.cont [3/16] 0.0, 128
        %855 = vxpose.xlu0.b32.cont [4/16] 0.0, 128
        %856 = vxpose.xlu0.b32.cont [5/16] 0.0, 128
        %857 = vxpose.xlu0.b32.cont [6/16] 0.0, 128
        %858 = vxpose.xlu0.b32.cont [7/16] 0.0, 128
        %859 = vxpose.xlu0.b32.cont [8/16] 0.0, 128
        %860 = vxpose.xlu0.b32.cont [9/16] 0.0, 128
        %861 = vxpose.xlu0.b32.cont [10/16] 0.0, 128
        %862 = vxpose.xlu0.b32.cont [11/16] 0.0, 128
        %863 = vxpose.xlu0.b32.cont [12/16] 0.0, 128
        %864 = vxpose.xlu0.b32.cont [13/16] 0.0, 128
        %865 = vxpose.xlu0.b32.cont [14/16] 0.0, 128
        %866 = vxpose.xlu0.b32.cont [15/16] 0.0, 128
        %867 = vxpose.xlu0.b32.end [16/16] 0.0, 128
        %v868 = vpop.trf.xlu0
        %v869 = vpop.trf.xlu0
        %v870 = vpop.trf.xlu0
        %v871 = vpop.trf.xlu0
        %v872 = vpop.trf.xlu0
        %v873 = vpop.trf.xlu0
        %v874 = vpop.trf.xlu0
        %v875 = vpop.trf.xlu0
        %v876 = vpop.trf.xlu0
        %v877 = vpop.trf.xlu0
        %v878 = vpop.trf.xlu0
        %v879 = vpop.trf.xlu0
        %v880 = vpop.trf.xlu0
        %v881 = vpop.trf.xlu0
        %v882 = vpop.trf.xlu0
        %v883 = vpop.trf.xlu0
        %v885 = vsel %vm592, %v868, 0
        %v888 = vsel %vm592, %v869, 0
        %v891 = vsel %vm592, %v870, 0
        %v894 = vsel %vm592, %v871, 0
        %v897 = vsel %vm592, %v872, 0
        %v900 = vsel %vm592, %v873, 0
        %v903 = vsel %vm592, %v874, 0
        %v906 = vsel %vm592, %v875, 0
        %908 = vmatpush.msra.mxu0 0.0
        %909 = vmatpush.msra.mxu0 0.0
        %910 = vmatpush.msra.mxu0 0.0
        %911 = vmatpush.msra.mxu0 0.0
        %912 = vmatpush.msra.mxu0 0.0
        %913 = vmatpush.msra.mxu0 0.0
        %914 = vmatpush.msra.mxu0 0.0
        %915 = vmatpush.msra.mxu0 0.0
        %916 = vmatpush.msra.mxu0 0.0
        %917 = vmatpush.msra.mxu0 0.0
        %918 = vmatpush.msra.mxu0 0.0
        %919 = vmatpush.msra.mxu0 0.0
        %920 = vmatpush.msra.mxu0 0.0
        %921 = vmatpush.msra.mxu0 0.0
        %922 = vmatpush.msra.mxu0 0.0
        %923 = vmatpush.msra.mxu0 %v542
        %924 = vmatmul.f32.gmra.mxu0 %v885
        %v925 = vpop.f32.mrf.mxu0
        %v926 = vadd.f32 0.0, %v925
        %927 = vmatmul.f32.gmra.mxu0 %v888
        %v928 = vpop.f32.mrf.mxu0
        %v929 = vadd.f32 0.0, %v928
        %930 = vmatmul.f32.gmra.mxu0 %v891
        %v931 = vpop.f32.mrf.mxu0
        %v932 = vadd.f32 0.0, %v931
        %933 = vmatmul.f32.gmra.mxu0 %v894
        %v934 = vpop.f32.mrf.mxu0
        %v935 = vadd.f32 0.0, %v934
        %936 = vmatmul.f32.gmra.mxu0 %v897
        %v937 = vpop.f32.mrf.mxu0
        %v938 = vadd.f32 0.0, %v937
        %939 = vmatmul.f32.gmra.mxu0 %v900
        %v940 = vpop.f32.mrf.mxu0
        %v941 = vadd.f32 0.0, %v940
        %942 = vmatmul.f32.gmra.mxu0 %v903
        %v943 = vpop.f32.mrf.mxu0
        %v944 = vadd.f32 0.0, %v943
        %945 = vmatmul.f32.gmra.mxu0 %v906
        %v946 = vpop.f32.mrf.mxu0
        %v947 = vadd.f32 0.0, %v946
        %948 = vdwg.mxu0
        %vm949 = vcmask 523264
        %v950 = vsel %vm949, %v635, -inf
        %951 = vmax.xlane.f32.xlu0 %v950
        %v952 = vpop.xlane.xlu0 %951
        %v953 = vsel %vm949, %v638, -inf
        %954 = vmax.xlane.f32.xlu0 %v953
        %v955 = vpop.xlane.xlu0 %954
        %v956 = vsel %vm949, %v641, -inf
        %957 = vmax.xlane.f32.xlu0 %v956
        %v958 = vpop.xlane.xlu0 %957
        %v959 = vsel %vm949, %v644, -inf
        %960 = vmax.xlane.f32.xlu0 %v959
        %v961 = vpop.xlane.xlu0 %960
        %v962 = vsel %vm949, %v647, -inf
        %963 = vmax.xlane.f32.xlu0 %v962
        %v964 = vpop.xlane.xlu0 %963
        %v965 = vsel %vm949, %v650, -inf
        %966 = vmax.xlane.f32.xlu0 %v965
        %v967 = vpop.xlane.xlu0 %966
        %v968 = vsel %vm949, %v653, -inf
        %969 = vmax.xlane.f32.xlu0 %v968
        %v970 = vpop.xlane.xlu0 %969
        %v971 = vsel %vm949, %v656, -inf
        %972 = vmax.xlane.f32.xlu0 %v971
        %v973 = vpop.xlane.xlu0 %972
        %v974 = vsel %vm949, %v732, -inf
        %975 = vmax.xlane.f32.xlu0 %v974
        %v976 = vpop.xlane.xlu0 %975
        %v977 = vsel %vm949, %v735, -inf
        %978 = vmax.xlane.f32.xlu0 %v977
        %v979 = vpop.xlane.xlu0 %978
        %v980 = vsel %vm949, %v738, -inf
        %981 = vmax.xlane.f32.xlu0 %v980
        %v982 = vpop.xlane.xlu0 %981
        %v983 = vsel %vm949, %v741, -inf
        %984 = vmax.xlane.f32.xlu0 %v983
        %v985 = vpop.xlane.xlu0 %984
        %v986 = vsel %vm949, %v744, -inf
        %987 = vmax.xlane.f32.xlu0 %v986
        %v988 = vpop.xlane.xlu0 %987
        %v989 = vsel %vm949, %v747, -inf
        %990 = vmax.xlane.f32.xlu0 %v989
        %v991 = vpop.xlane.xlu0 %990
        %v992 = vsel %vm949, %v750, -inf
        %993 = vmax.xlane.f32.xlu0 %v992
        %v994 = vpop.xlane.xlu0 %993
        %v995 = vsel %vm949, %v753, -inf
        %996 = vmax.xlane.f32.xlu0 %v995
        %v997 = vpop.xlane.xlu0 %996
        %v998 = vsel %vm949, %v829, -inf
        %999 = vmax.xlane.f32.xlu0 %v998
        %v1000 = vpop.xlane.xlu0 %999
        %v1001 = vsel %vm949, %v832, -inf
        %1002 = vmax.xlane.f32.xlu0 %v1001
        %v1003 = vpop.xlane.xlu0 %1002
        %v1004 = vsel %vm949, %v835, -inf
        %1005 = vmax.xlane.f32.xlu0 %v1004
        %v1006 = vpop.xlane.xlu0 %1005
        %v1007 = vsel %vm949, %v838, -inf
        %1008 = vmax.xlane.f32.xlu0 %v1007
        %v1009 = vpop.xlane.xlu0 %1008
        %v1010 = vsel %vm949, %v841, -inf
        %1011 = vmax.xlane.f32.xlu0 %v1010
        %v1012 = vpop.xlane.xlu0 %1011
        %v1013 = vsel %vm949, %v844, -inf
        %1014 = vmax.xlane.f32.xlu0 %v1013
        %v1015 = vpop.xlane.xlu0 %1014
        %v1016 = vsel %vm949, %v847, -inf
        %1017 = vmax.xlane.f32.xlu0 %v1016
        %v1018 = vpop.xlane.xlu0 %1017
        %v1019 = vsel %vm949, %v850, -inf
        %1020 = vmax.xlane.f32.xlu0 %v1019
        %v1021 = vpop.xlane.xlu0 %1020
        %v1022 = vsel %vm949, %v926, -inf
        %1023 = vmax.xlane.f32.xlu0 %v1022
        %v1024 = vpop.xlane.xlu0 %1023
        %v1025 = vsel %vm949, %v929, -inf
        %1026 = vmax.xlane.f32.xlu0 %v1025
        %v1027 = vpop.xlane.xlu0 %1026
        %v1028 = vsel %vm949, %v932, -inf
        %1029 = vmax.xlane.f32.xlu0 %v1028
        %v1030 = vpop.xlane.xlu0 %1029
        %v1031 = vsel %vm949, %v935, -inf
        %1032 = vmax.xlane.f32.xlu0 %v1031
        %v1033 = vpop.xlane.xlu0 %1032
        %v1034 = vsel %vm949, %v938, -inf
        %1035 = vmax.xlane.f32.xlu0 %v1034
        %v1036 = vpop.xlane.xlu0 %1035
        %v1037 = vsel %vm949, %v941, -inf
        %1038 = vmax.xlane.f32.xlu0 %v1037
        %v1039 = vpop.xlane.xlu0 %1038
        %v1040 = vsel %vm949, %v944, -inf
        %1041 = vmax.xlane.f32.xlu0 %v1040
        %v1042 = vpop.xlane.xlu0 %1041
        %v1043 = vsel %vm949, %v947, -inf
        %1044 = vmax.xlane.f32.xlu0 %v1043
        %v1045 = vpop.xlane.xlu0 %1044
        %v1046 = vsub.f32 %v635, %v952
        %v1047 = vsub.f32 %v638, %v955
        %v1048 = vsub.f32 %v641, %v958
        %v1049 = vsub.f32 %v644, %v961
        %v1050 = vsub.f32 %v647, %v964
        %v1051 = vsub.f32 %v650, %v967
        %v1052 = vsub.f32 %v653, %v970
        %v1053 = vsub.f32 %v656, %v973
        %v1054 = vsub.f32 %v732, %v976
        %v1055 = vsub.f32 %v735, %v979
        %v1056 = vsub.f32 %v738, %v982
        %v1057 = vsub.f32 %v741, %v985
        %v1058 = vsub.f32 %v744, %v988
        %v1059 = vsub.f32 %v747, %v991
        %v1060 = vsub.f32 %v750, %v994
        %v1061 = vsub.f32 %v753, %v997
        %v1062 = vsub.f32 %v829, %v1000
        %v1063 = vsub.f32 %v832, %v1003
        %v1064 = vsub.f32 %v835, %v1006
        %v1065 = vsub.f32 %v838, %v1009
        %v1066 = vsub.f32 %v841, %v1012
        %v1067 = vsub.f32 %v844, %v1015
        %v1068 = vsub.f32 %v847, %v1018
        %v1069 = vsub.f32 %v850, %v1021
        %v1070 = vsub.f32 %v926, %v1024
        %v1071 = vsub.f32 %v929, %v1027
        %v1072 = vsub.f32 %v932, %v1030
        %v1073 = vsub.f32 %v935, %v1033
        %v1074 = vsub.f32 %v938, %v1036
        %v1075 = vsub.f32 %v941, %v1039
        %v1076 = vsub.f32 %v944, %v1042
        %v1077 = vsub.f32 %v947, %v1045
        %v1078 = vmul.f32 %v1046, 1.442695
        %v1079 = vpow.pop %v1078
        %v1080 = vmul.f32 %v1047, 1.442695
        %v1081 = vpow.pop %v1080
        %v1082 = vmul.f32 %v1048, 1.442695
        %v1083 = vpow.pop %v1082
        %v1084 = vmul.f32 %v1049, 1.442695
        %v1085 = vpow.pop %v1084
        %v1086 = vmul.f32 %v1050, 1.442695
        %v1087 = vpow.pop %v1086
        %v1088 = vmul.f32 %v1051, 1.442695
        %v1089 = vpow.pop %v1088
        %v1090 = vmul.f32 %v1052, 1.442695
        %v1091 = vpow.pop %v1090
        %v1092 = vmul.f32 %v1053, 1.442695
        %v1093 = vpow.pop %v1092
        %v1094 = vmul.f32 %v1054, 1.442695
        %v1095 = vpow.pop %v1094
        %v1096 = vmul.f32 %v1055, 1.442695
        %v1097 = vpow.pop %v1096
        %v1098 = vmul.f32 %v1056, 1.442695
        %v1099 = vpow.pop %v1098
        %v1100 = vmul.f32 %v1057, 1.442695
        %v1101 = vpow.pop %v1100
        %v1102 = vmul.f32 %v1058, 1.442695
        %v1103 = vpow.pop %v1102
        %v1104 = vmul.f32 %v1059, 1.442695
        %v1105 = vpow.pop %v1104
        %v1106 = vmul.f32 %v1060, 1.442695
        %v1107 = vpow.pop %v1106
        %v1108 = vmul.f32 %v1061, 1.442695
        %v1109 = vpow.pop %v1108
        %v1110 = vmul.f32 %v1062, 1.442695
        %v1111 = vpow.pop %v1110
        %v1112 = vmul.f32 %v1063, 1.442695
        %v1113 = vpow.pop %v1112
        %v1114 = vmul.f32 %v1064, 1.442695
        %v1115 = vpow.pop %v1114
        %v1116 = vmul.f32 %v1065, 1.442695
        %v1117 = vpow.pop %v1116
        %v1118 = vmul.f32 %v1066, 1.442695
        %v1119 = vpow.pop %v1118
        %v1120 = vmul.f32 %v1067, 1.442695
        %v1121 = vpow.pop %v1120
        %v1122 = vmul.f32 %v1068, 1.442695
        %v1123 = vpow.pop %v1122
        %v1124 = vmul.f32 %v1069, 1.442695
        %v1125 = vpow.pop %v1124
        %v1126 = vmul.f32 %v1070, 1.442695
        %v1127 = vpow.pop %v1126
        %v1128 = vmul.f32 %v1071, 1.442695
        %v1129 = vpow.pop %v1128
        %v1130 = vmul.f32 %v1072, 1.442695
        %v1131 = vpow.pop %v1130
        %v1132 = vmul.f32 %v1073, 1.442695
        %v1133 = vpow.pop %v1132
        %v1134 = vmul.f32 %v1074, 1.442695
        %v1135 = vpow.pop %v1134
        %v1136 = vmul.f32 %v1075, 1.442695
        %v1137 = vpow.pop %v1136
        %v1138 = vmul.f32 %v1076, 1.442695
        %v1139 = vpow.pop %v1138
        %v1140 = vmul.f32 %v1077, 1.442695
        %v1141 = vpow.pop %v1140
        %v1142 = vsel %vm949, %v1079, 0.0
        %1143 = vadd.xlane.f32.xlu0 %v1142
        %v1144 = vpop.xlane.xlu0 %1143
        %v1145 = vsel %vm949, %v1081, 0.0
        %1146 = vadd.xlane.f32.xlu0 %v1145
        %v1147 = vpop.xlane.xlu0 %1146
        %v1148 = vsel %vm949, %v1083, 0.0
        %1149 = vadd.xlane.f32.xlu0 %v1148
        %v1150 = vpop.xlane.xlu0 %1149
        %v1151 = vsel %vm949, %v1085, 0.0
        %1152 = vadd.xlane.f32.xlu0 %v1151
        %v1153 = vpop.xlane.xlu0 %1152
        %v1154 = vsel %vm949, %v1087, 0.0
        %1155 = vadd.xlane.f32.xlu0 %v1154
        %v1156 = vpop.xlane.xlu0 %1155
        %v1157 = vsel %vm949, %v1089, 0.0
        %1158 = vadd.xlane.f32.xlu0 %v1157
        %v1159 = vpop.xlane.xlu0 %1158
        %v1160 = vsel %vm949, %v1091, 0.0
        %1161 = vadd.xlane.f32.xlu0 %v1160
        %v1162 = vpop.xlane.xlu0 %1161
        %v1163 = vsel %vm949, %v1093, 0.0
        %1164 = vadd.xlane.f32.xlu0 %v1163
        %v1165 = vpop.xlane.xlu0 %1164
        %v1166 = vsel %vm949, %v1095, 0.0
        %1167 = vadd.xlane.f32.xlu0 %v1166
        %v1168 = vpop.xlane.xlu0 %1167
        %v1169 = vsel %vm949, %v1097, 0.0
        %1170 = vadd.xlane.f32.xlu0 %v1169
        %v1171 = vpop.xlane.xlu0 %1170
        %v1172 = vsel %vm949, %v1099, 0.0
        %1173 = vadd.xlane.f32.xlu0 %v1172
        %v1174 = vpop.xlane.xlu0 %1173
        %v1175 = vsel %vm949, %v1101, 0.0
        %1176 = vadd.xlane.f32.xlu0 %v1175
        %v1177 = vpop.xlane.xlu0 %1176
        %v1178 = vsel %vm949, %v1103, 0.0
        %1179 = vadd.xlane.f32.xlu0 %v1178
        %v1180 = vpop.xlane.xlu0 %1179
        %v1181 = vsel %vm949, %v1105, 0.0
        %1182 = vadd.xlane.f32.xlu0 %v1181
        %v1183 = vpop.xlane.xlu0 %1182
        %v1184 = vsel %vm949, %v1107, 0.0
        %1185 = vadd.xlane.f32.xlu0 %v1184
        %v1186 = vpop.xlane.xlu0 %1185
        %v1187 = vsel %vm949, %v1109, 0.0
        %1188 = vadd.xlane.f32.xlu0 %v1187
        %v1189 = vpop.xlane.xlu0 %1188
        %v1190 = vsel %vm949, %v1111, 0.0
        %1191 = vadd.xlane.f32.xlu0 %v1190
        %v1192 = vpop.xlane.xlu0 %1191
        %v1193 = vsel %vm949, %v1113, 0.0
        %1194 = vadd.xlane.f32.xlu0 %v1193
        %v1195 = vpop.xlane.xlu0 %1194
        %v1196 = vsel %vm949, %v1115, 0.0
        %1197 = vadd.xlane.f32.xlu0 %v1196
        %v1198 = vpop.xlane.xlu0 %1197
        %v1199 = vsel %vm949, %v1117, 0.0
        %1200 = vadd.xlane.f32.xlu0 %v1199
        %v1201 = vpop.xlane.xlu0 %1200
        %v1202 = vsel %vm949, %v1119, 0.0
        %1203 = vadd.xlane.f32.xlu0 %v1202
        %v1204 = vpop.xlane.xlu0 %1203
        %v1205 = vsel %vm949, %v1121, 0.0
        %1206 = vadd.xlane.f32.xlu0 %v1205
        %v1207 = vpop.xlane.xlu0 %1206
        %v1208 = vsel %vm949, %v1123, 0.0
        %1209 = vadd.xlane.f32.xlu0 %v1208
        %v1210 = vpop.xlane.xlu0 %1209
        %v1211 = vsel %vm949, %v1125, 0.0
        %1212 = vadd.xlane.f32.xlu0 %v1211
        %v1213 = vpop.xlane.xlu0 %1212
        %v1214 = vsel %vm949, %v1127, 0.0
        %1215 = vadd.xlane.f32.xlu0 %v1214
        %v1216 = vpop.xlane.xlu0 %1215
        %v1217 = vsel %vm949, %v1129, 0.0
        %1218 = vadd.xlane.f32.xlu0 %v1217
        %v1219 = vpop.xlane.xlu0 %1218
        %v1220 = vsel %vm949, %v1131, 0.0
        %1221 = vadd.xlane.f32.xlu0 %v1220
        %v1222 = vpop.xlane.xlu0 %1221
        %v1223 = vsel %vm949, %v1133, 0.0
        %1224 = vadd.xlane.f32.xlu0 %v1223
        %v1225 = vpop.xlane.xlu0 %1224
        %v1226 = vsel %vm949, %v1135, 0.0
        %1227 = vadd.xlane.f32.xlu0 %v1226
        %v1228 = vpop.xlane.xlu0 %1227
        %v1229 = vsel %vm949, %v1137, 0.0
        %1230 = vadd.xlane.f32.xlu0 %v1229
        %v1231 = vpop.xlane.xlu0 %1230
        %v1232 = vsel %vm949, %v1139, 0.0
        %1233 = vadd.xlane.f32.xlu0 %v1232
        %v1234 = vpop.xlane.xlu0 %1233
        %v1235 = vsel %vm949, %v1141, 0.0
        %1236 = vadd.xlane.f32.xlu0 %v1235
        %v1237 = vpop.xlane.xlu0 %1236
        %v1238 = vrcp.pop %v1144
        %v1239 = vrcp.pop %v1147
        %v1240 = vrcp.pop %v1150
        %v1241 = vrcp.pop %v1153
        %v1242 = vrcp.pop %v1156
        %v1243 = vrcp.pop %v1159
        %v1244 = vrcp.pop %v1162
        %v1245 = vrcp.pop %v1165
        %v1246 = vrcp.pop %v1168
        %v1247 = vrcp.pop %v1171
        %v1248 = vrcp.pop %v1174
        %v1249 = vrcp.pop %v1177
        %v1250 = vrcp.pop %v1180
        %v1251 = vrcp.pop %v1183
        %v1252 = vrcp.pop %v1186
        %v1253 = vrcp.pop %v1189
        %v1254 = vrcp.pop %v1192
        %v1255 = vrcp.pop %v1195
        %v1256 = vrcp.pop %v1198
        %v1257 = vrcp.pop %v1201
        %v1258 = vrcp.pop %v1204
        %v1259 = vrcp.pop %v1207
        %v1260 = vrcp.pop %v1210
        %v1261 = vrcp.pop %v1213
        %v1262 = vrcp.pop %v1216
        %v1263 = vrcp.pop %v1219
        %v1264 = vrcp.pop %v1222
        %v1265 = vrcp.pop %v1225
        %v1266 = vrcp.pop %v1228
        %v1267 = vrcp.pop %v1231
        %v1268 = vrcp.pop %v1234
        %v1269 = vrcp.pop %v1237
        %v1270 = vmul.f32 %v1079, %v1238
        %v1271 = vmul.f32 %v1081, %v1239
        %v1272 = vmul.f32 %v1083, %v1240
        %v1273 = vmul.f32 %v1085, %v1241
        %v1274 = vmul.f32 %v1087, %v1242
        %v1275 = vmul.f32 %v1089, %v1243
        %v1276 = vmul.f32 %v1091, %v1244
        %v1277 = vmul.f32 %v1093, %v1245
        %v1278 = vmul.f32 %v1095, %v1246
        %v1279 = vmul.f32 %v1097, %v1247
        %v1280 = vmul.f32 %v1099, %v1248
        %v1281 = vmul.f32 %v1101, %v1249
        %v1282 = vmul.f32 %v1103, %v1250
        %v1283 = vmul.f32 %v1105, %v1251
        %v1284 = vmul.f32 %v1107, %v1252
        %v1285 = vmul.f32 %v1109, %v1253
        %v1286 = vmul.f32 %v1111, %v1254
        %v1287 = vmul.f32 %v1113, %v1255
        %v1288 = vmul.f32 %v1115, %v1256
        %v1289 = vmul.f32 %v1117, %v1257
        %v1290 = vmul.f32 %v1119, %v1258
        %v1291 = vmul.f32 %v1121, %v1259
        %v1292 = vmul.f32 %v1123, %v1260
        %v1293 = vmul.f32 %v1125, %v1261
        %v1294 = vmul.f32 %v1127, %v1262
        %v1295 = vmul.f32 %v1129, %v1263
        %v1296 = vmul.f32 %v1131, %v1264
        %v1297 = vmul.f32 %v1133, %v1265
        %v1298 = vmul.f32 %v1135, %v1266
        %v1299 = vmul.f32 %v1137, %v1267
        %v1300 = vmul.f32 %v1139, %v1268
        %v1301 = vmul.f32 %v1141, %v1269
        %v1303 = vsel %vm949, %v545, 0
        %v1306 = vsel %vm949, %v1270, 0
        %v1309 = vsel %vm949, %v1271, 0
        %v1312 = vsel %vm949, %v1272, 0
        %v1315 = vsel %vm949, %v1273, 0
        %v1318 = vsel %vm949, %v1274, 0
        %v1321 = vsel %vm949, %v1275, 0
        %v1324 = vsel %vm949, %v1276, 0
        %v1327 = vsel %vm949, %v1277, 0
        %1329 = vmatpush.xpose.msra.mxu0 0.0
        %1330 = vmatpush.xpose.msra.mxu0 0.0
        %1331 = vmatpush.xpose.msra.mxu0 0.0
        %1332 = vmatpush.xpose.msra.mxu0 0.0
        %1333 = vmatpush.xpose.msra.mxu0 0.0
        %1334 = vmatpush.xpose.msra.mxu0 0.0
        %1335 = vmatpush.xpose.msra.mxu0 0.0
        %1336 = vmatpush.xpose.msra.mxu0 0.0
        %1337 = vmatpush.xpose.msra.mxu0 %v1327
        %1338 = vmatpush.xpose.msra.mxu0 %v1324
        %1339 = vmatpush.xpose.msra.mxu0 %v1321
        %1340 = vmatpush.xpose.msra.mxu0 %v1318
        %1341 = vmatpush.xpose.msra.mxu0 %v1315
        %1342 = vmatpush.xpose.msra.mxu0 %v1312
        %1343 = vmatpush.xpose.msra.mxu0 %v1309
        %1344 = vmatpush.xpose.msra.mxu0 %v1306
        %1345 = vmatmul.f32.gmra.mxu0 %v1303
        %v1346 = vpop.f32.mrf.mxu0
        %v1347 = vadd.f32 0.0, %v1346
        %1348 = vdwg.mxu0
        %v1350 = vsel %vm949, %v548, 0
        %v1353 = vsel %vm949, %v1278, 0
        %v1356 = vsel %vm949, %v1279, 0
        %v1359 = vsel %vm949, %v1280, 0
        %v1362 = vsel %vm949, %v1281, 0
        %v1365 = vsel %vm949, %v1282, 0
        %v1368 = vsel %vm949, %v1283, 0
        %v1371 = vsel %vm949, %v1284, 0
        %v1374 = vsel %vm949, %v1285, 0
        %1376 = vmatpush.xpose.msra.mxu0 0.0
        %1377 = vmatpush.xpose.msra.mxu0 0.0
        %1378 = vmatpush.xpose.msra.mxu0 0.0
        %1379 = vmatpush.xpose.msra.mxu0 0.0
        %1380 = vmatpush.xpose.msra.mxu0 0.0
        %1381 = vmatpush.xpose.msra.mxu0 0.0
        %1382 = vmatpush.xpose.msra.mxu0 0.0
        %1383 = vmatpush.xpose.msra.mxu0 0.0
        %1384 = vmatpush.xpose.msra.mxu0 %v1374
        %1385 = vmatpush.xpose.msra.mxu0 %v1371
        %1386 = vmatpush.xpose.msra.mxu0 %v1368
        %1387 = vmatpush.xpose.msra.mxu0 %v1365
        %1388 = vmatpush.xpose.msra.mxu0 %v1362
        %1389 = vmatpush.xpose.msra.mxu0 %v1359
        %1390 = vmatpush.xpose.msra.mxu0 %v1356
        %1391 = vmatpush.xpose.msra.mxu0 %v1353
        %1392 = vmatmul.f32.gmra.mxu0 %v1350
        %v1393 = vpop.f32.mrf.mxu0
        %v1394 = vadd.f32 0.0, %v1393
        %1395 = vdwg.mxu0
        %v1397 = vsel %vm949, %v551, 0
        %v1400 = vsel %vm949, %v1286, 0
        %v1403 = vsel %vm949, %v1287, 0
        %v1406 = vsel %vm949, %v1288, 0
        %v1409 = vsel %vm949, %v1289, 0
        %v1412 = vsel %vm949, %v1290, 0
        %v1415 = vsel %vm949, %v1291, 0
        %v1418 = vsel %vm949, %v1292, 0
        %v1421 = vsel %vm949, %v1293, 0
        %1423 = vmatpush.xpose.msra.mxu0 0.0
        %1424 = vmatpush.xpose.msra.mxu0 0.0
        %1425 = vmatpush.xpose.msra.mxu0 0.0
        %1426 = vmatpush.xpose.msra.mxu0 0.0
        %1427 = vmatpush.xpose.msra.mxu0 0.0
        %1428 = vmatpush.xpose.msra.mxu0 0.0
        %1429 = vmatpush.xpose.msra.mxu0 0.0
        %1430 = vmatpush.xpose.msra.mxu0 0.0
        %1431 = vmatpush.xpose.msra.mxu0 %v1421
        %1432 = vmatpush.xpose.msra.mxu0 %v1418
        %1433 = vmatpush.xpose.msra.mxu0 %v1415
        %1434 = vmatpush.xpose.msra.mxu0 %v1412
        %1435 = vmatpush.xpose.msra.mxu0 %v1409
        %1436 = vmatpush.xpose.msra.mxu0 %v1406
        %1437 = vmatpush.xpose.msra.mxu0 %v1403
        %1438 = vmatpush.xpose.msra.mxu0 %v1400
        %1439 = vmatmul.f32.gmra.mxu0 %v1397
        %v1440 = vpop.f32.mrf.mxu0
        %v1441 = vadd.f32 0.0, %v1440
        %1442 = vdwg.mxu0
        %v1444 = vsel %vm949, %v554, 0
        %v1447 = vsel %vm949, %v1294, 0
        %v1450 = vsel %vm949, %v1295, 0
        %v1453 = vsel %vm949, %v1296, 0
        %v1456 = vsel %vm949, %v1297, 0
        %v1459 = vsel %vm949, %v1298, 0
        %v1462 = vsel %vm949, %v1299, 0
        %v1465 = vsel %vm949, %v1300, 0
        %v1468 = vsel %vm949, %v1301, 0
        %1470 = vmatpush.xpose.msra.mxu0 0.0
        %1471 = vmatpush.xpose.msra.mxu0 0.0
        %1472 = vmatpush.xpose.msra.mxu0 0.0
        %1473 = vmatpush.xpose.msra.mxu0 0.0
        %1474 = vmatpush.xpose.msra.mxu0 0.0
        %1475 = vmatpush.xpose.msra.mxu0 0.0
        %1476 = vmatpush.xpose.msra.mxu0 0.0
        %1477 = vmatpush.xpose.msra.mxu0 0.0
        %1478 = vmatpush.xpose.msra.mxu0 %v1468
        %1479 = vmatpush.xpose.msra.mxu0 %v1465
        %1480 = vmatpush.xpose.msra.mxu0 %v1462
        %1481 = vmatpush.xpose.msra.mxu0 %v1459
        %1482 = vmatpush.xpose.msra.mxu0 %v1456
        %1483 = vmatpush.xpose.msra.mxu0 %v1453
        %1484 = vmatpush.xpose.msra.mxu0 %v1450
        %1485 = vmatpush.xpose.msra.mxu0 %v1447
        %1486 = vmatmul.f32.gmra.mxu0 %v1444
        %v1487 = vpop.f32.mrf.mxu0
        %v1488 = vadd.f32 0.0, %v1487
        %1489 = vdwg.mxu0
        %v1490 = vld [vmem:[%s6] sm:$0xff]
        %v1491 = vld [vmem:[%s6 + $0x8] sm:$0xff]
        %v1492 = vld [vmem:[%s6 + $0x10] sm:$0xff]
        %v1493 = vld [vmem:[%s6 + $0x18] sm:$0xff]
        %v1494 = vld [vmem:[%s7] sm:$0xff]
        %v1495 = vld [vmem:[%s7 + $0x8] sm:$0xff]
        %v1496 = vld [vmem:[%s7 + $0x10] sm:$0xff]
        %v1497 = vld [vmem:[%s7 + $0x18] sm:$0xff]
        %v1498 = vsel %vm592, %v1490, 0.0
        %1499 = vadd.xlane.f32.xlu0 %v1498
        %v1500 = vpop.xlane.xlu0 %1499
        %v1501 = vsel %vm592, %v1491, 0.0
        %1502 = vadd.xlane.f32.xlu0 %v1501
        %v1503 = vpop.xlane.xlu0 %1502
        %v1504 = vsel %vm592, %v1492, 0.0
        %1505 = vadd.xlane.f32.xlu0 %v1504
        %v1506 = vpop.xlane.xlu0 %1505
        %v1507 = vsel %vm592, %v1493, 0.0
        %1508 = vadd.xlane.f32.xlu0 %v1507
        %v1509 = vpop.xlane.xlu0 %1508
        %v1510 = vmul.f32 %v1490, %v1490
        %v1511 = vmul.f32 %v1491, %v1491
        %v1512 = vmul.f32 %v1492, %v1492
        %v1513 = vmul.f32 %v1493, %v1493
        %v1514 = vsel %vm592, %v1510, 0.0
        %1515 = vadd.xlane.f32.xlu0 %v1514
        %v1516 = vpop.xlane.xlu0 %1515
        %v1517 = vsel %vm592, %v1511, 0.0
        %1518 = vadd.xlane.f32.xlu0 %v1517
        %v1519 = vpop.xlane.xlu0 %1518
        %v1520 = vsel %vm592, %v1512, 0.0
        %1521 = vadd.xlane.f32.xlu0 %v1520
        %v1522 = vpop.xlane.xlu0 %1521
        %v1523 = vsel %vm592, %v1513, 0.0
        %1524 = vadd.xlane.f32.xlu0 %v1523
        %v1525 = vpop.xlane.xlu0 %1524
        %v1526 = vsel %vm949, %v1347, 0.0
        %1527 = vadd.xlane.f32.xlu0 %v1526
        %v1528 = vpop.xlane.xlu0 %1527
        %v1529 = vsel %vm949, %v1394, 0.0
        %1530 = vadd.xlane.f32.xlu0 %v1529
        %v1531 = vpop.xlane.xlu0 %1530
        %v1532 = vsel %vm949, %v1441, 0.0
        %1533 = vadd.xlane.f32.xlu0 %v1532
        %v1534 = vpop.xlane.xlu0 %1533
        %v1535 = vsel %vm949, %v1488, 0.0
        %1536 = vadd.xlane.f32.xlu0 %v1535
        %v1537 = vpop.xlane.xlu0 %1536
        %v1538 = vmul.f32 %v1347, %v1347
        %v1539 = vmul.f32 %v1394, %v1394
        %v1540 = vmul.f32 %v1441, %v1441
        %v1541 = vmul.f32 %v1488, %v1488
        %v1542 = vsel %vm949, %v1538, 0.0
        %1543 = vadd.xlane.f32.xlu0 %v1542
        %v1544 = vpop.xlane.xlu0 %1543
        %v1545 = vsel %vm949, %v1539, 0.0
        %1546 = vadd.xlane.f32.xlu0 %v1545
        %v1547 = vpop.xlane.xlu0 %1546
        %v1548 = vsel %vm949, %v1540, 0.0
        %1549 = vadd.xlane.f32.xlu0 %v1548
        %v1550 = vpop.xlane.xlu0 %1549
        %v1551 = vsel %vm949, %v1541, 0.0
        %1552 = vadd.xlane.f32.xlu0 %v1551
        %v1553 = vpop.xlane.xlu0 %1552
        %v1554 = vmul.f32 %v1528, %v1500
        %v1555 = vmul.f32 %v1531, %v1503
        %v1556 = vmul.f32 %v1534, %v1506
        %v1557 = vmul.f32 %v1537, %v1509
        %v1558 = vmul.f32 %v1494, 512.0
        %v1559 = vmul.f32 %v1495, 512.0
        %v1560 = vmul.f32 %v1496, 512.0
        %v1561 = vmul.f32 %v1497, 512.0
        %v1562 = vadd.f32 %v1554, %v1558
        %v1563 = vadd.f32 %v1555, %v1559
        %v1564 = vadd.f32 %v1556, %v1560
        %v1565 = vadd.f32 %v1557, %v1561
        %vm1566 = vcmask 7168
        %v1567 = vsel %vm1566, %v1562, 0.0
        %v1568 = vsel %vm1566, %v1563, 0.0
        %v1569 = vadd.f32 %v1567, %v1568
        %v1570 = vsel %vm1566, %v1564, 0.0
        %v1571 = vadd.f32 %v1569, %v1570
        %v1572 = vsel %vm1566, %v1565, 0.0
        %v1573 = vadd.f32 %v1571, %v1572
        %1574 = vadd.xlane.f32.xlu0 %v1573
        %v1575 = vpop.xlane.xlu0 %1574
        %v1576 = vrot.slane %v1575, 4
        %v1577 = vadd.f32 %v1575, %v1576
        %v1578 = vrot.slane %v1577, 2
        %v1579 = vadd.f32 %v1577, %v1578
        %v1580 = vrot.slane %v1579, 1
        %v1581 = vadd.f32 %v1579, %v1580
        %s1582 = vtos %v1581
        %v1583 = vmul.f32 %v1544, %v1516
        %v1584 = vmul.f32 %v1547, %v1519
        %v1585 = vmul.f32 %v1550, %v1522
        %v1586 = vmul.f32 %v1553, %v1525
        %v1587 = vmul.f32 %v1494, 2.0
        %v1588 = vmul.f32 %v1495, 2.0
        %v1589 = vmul.f32 %v1496, 2.0
        %v1590 = vmul.f32 %v1497, 2.0
        %v1591 = vmul.f32 %v1587, %v1528
        %v1592 = vmul.f32 %v1588, %v1531
        %v1593 = vmul.f32 %v1589, %v1534
        %v1594 = vmul.f32 %v1590, %v1537
        %v1595 = vmul.f32 %v1591, %v1500
        %v1596 = vmul.f32 %v1592, %v1503
        %v1597 = vmul.f32 %v1593, %v1506
        %v1598 = vmul.f32 %v1594, %v1509
        %v1599 = vadd.f32 %v1583, %v1595
        %v1600 = vadd.f32 %v1584, %v1596
        %v1601 = vadd.f32 %v1585, %v1597
        %v1602 = vadd.f32 %v1586, %v1598
        %v1603 = vmul.f32 %v1558, %v1494
        %v1604 = vmul.f32 %v1559, %v1495
        %v1605 = vmul.f32 %v1560, %v1496
        %v1606 = vmul.f32 %v1561, %v1497
        %v1607 = vadd.f32 %v1599, %v1603
        %v1608 = vadd.f32 %v1600, %v1604
        %v1609 = vadd.f32 %v1601, %v1605
        %v1610 = vadd.f32 %v1602, %v1606
        %v1611 = vsel %vm1566, %v1607, 0.0
        %v1612 = vsel %vm1566, %v1608, 0.0
        %v1613 = vadd.f32 %v1611, %v1612
        %v1614 = vsel %vm1566, %v1609, 0.0
        %v1615 = vadd.f32 %v1613, %v1614
        %v1616 = vsel %vm1566, %v1610, 0.0
        %v1617 = vadd.f32 %v1615, %v1616
        %1618 = vadd.xlane.f32.xlu0 %v1617
        %v1619 = vpop.xlane.xlu0 %1618
        %v1620 = vrot.slane %v1619, 4
        %v1621 = vadd.f32 %v1619, %v1620
        %v1622 = vrot.slane %v1621, 2
        %v1623 = vadd.f32 %v1621, %v1622
        %v1624 = vrot.slane %v1623, 1
        %v1625 = vadd.f32 %v1623, %v1624
        %s1626 = vtos %v1625
        %v1627 = vrcp.pop 16384.0
        %v1628 = vmul.f32 16384.0, %v1627
        %v1629 = vsub.f32 1.0, %v1628
        %v1630 = vmul.f32 %v1627, %v1629
        %v1631 = vadd.f32 %v1627, %v1630
        %vm1632 = vweird.f32 %v1627
        %v1633 = vsel %vm1632, %v1627, %v1631
        %s1634 = vtos %v1633
        %s1635 = smul.f32 %s1582, %s1634
        %v1636 = vrcp.pop 16384.0
        %v1637 = vmul.f32 16384.0, %v1636
        %v1638 = vsub.f32 1.0, %v1637
        %v1639 = vmul.f32 %v1636, %v1638
        %v1640 = vadd.f32 %v1636, %v1639
        %vm1641 = vweird.f32 %v1636
        %v1642 = vsel %vm1641, %v1636, %v1640
        %s1643 = vtos %v1642
        %s1644 = smul.f32 %s1626, %s1643
        %s1645 = smul.f32 %s1635, %s1635
        %s1646 = ssub.f32 %s1644, %s1645
        %s1647 = smax.f32 %s1646, 0.0
        %s1648 = sadd.f32 %s1647, 1e-05
        %v1649 = vstv %s1648
        %v1650 = vrsqrt.pop %v1649
        %v1651 = vmul.f32 %v1650, %v1649
        %v1652 = vmul.f32 %v1651, %v1650
        %v1653 = vmul.f32 0.5, %v1652
        %v1654 = vsub.f32 1.5, %v1653
        %v1655 = vmul.f32 %v1650, %v1654
        %vm1656 = vweird.f32 %v1649
        %vm1657 = vweird.f32 %v1650
        %vm1658 = vmor %vm1656, %vm1657
        %v1659 = vsel %vm1658, %v1650, %v1655
        %s1660 = vtos %v1659
        %v1661 = vld [vmem:[%s8] sm:$0xff]
        %v1662 = vld [vmem:[%s8 + $0x8] sm:$0xff]
        %v1663 = vld [vmem:[%s8 + $0x10] sm:$0xff]
        %v1664 = vld [vmem:[%s8 + $0x18] sm:$0xff]
        %v1665 = vstv %s1660
        %v1666 = vmul.f32 %v1661, %v1665
        %v1667 = vmul.f32 %v1662, %v1665
        %v1668 = vmul.f32 %v1663, %v1665
        %v1669 = vmul.f32 %v1664, %v1665
        %v1670 = vstv %s1635
        %v1671 = vsub.f32 %v1494, %v1670
        %v1672 = vsub.f32 %v1495, %v1670
        %v1673 = vsub.f32 %v1496, %v1670
        %v1674 = vsub.f32 %v1497, %v1670
        %v1675 = vmul.f32 %v1671, %v1666
        %v1676 = vmul.f32 %v1672, %v1667
        %v1677 = vmul.f32 %v1673, %v1668
        %v1678 = vmul.f32 %v1674, %v1669
        %v1679 = vld [vmem:[%s9] sm:$0xff]
        %v1680 = vld [vmem:[%s9 + $0x8] sm:$0xff]
        %v1681 = vld [vmem:[%s9 + $0x10] sm:$0xff]
        %v1682 = vld [vmem:[%s9 + $0x18] sm:$0xff]
        %v1683 = vadd.f32 %v1675, %v1679
        %v1684 = vadd.f32 %v1676, %v1680
        %v1685 = vadd.f32 %v1677, %v1681
        %v1686 = vadd.f32 %v1678, %v1682
        %1688 = vset.pattern.permute.xlu0 0
        %1689 = vperm.xlu0 %1688, %v1666
        %v1690 = vpop.permute.xlu0 %1689
        %1693 = vset.pattern.permute.xlu0 0
        %1694 = vperm.xlu0 %1693, %v1667
        %v1695 = vpop.permute.xlu0 %1694
        %1698 = vset.pattern.permute.xlu0 0
        %1699 = vperm.xlu0 %1698, %v1668
        %v1700 = vpop.permute.xlu0 %1699
        %1703 = vset.pattern.permute.xlu0 0
        %1704 = vperm.xlu0 %1703, %v1669
        %v1705 = vpop.permute.xlu0 %1704
        %v1707 = vmul.f32 %v1490, %v1690
        %v1708 = vmul.f32 %v1491, %v1695
        %v1709 = vmul.f32 %v1492, %v1700
        %v1710 = vmul.f32 %v1493, %v1705
        %1712 = vset.pattern.permute.xlu0 0
        %1713 = vperm.xlu0 %1712, %v1707
        %v1714 = vpop.permute.xlu0 %1713
        %1717 = vset.pattern.permute.xlu0 0
        %1718 = vperm.xlu0 %1717, %v1708
        %v1719 = vpop.permute.xlu0 %1718
        %1722 = vset.pattern.permute.xlu0 0
        %1723 = vperm.xlu0 %1722, %v1709
        %v1724 = vpop.permute.xlu0 %1723
        %1727 = vset.pattern.permute.xlu0 0
        %1728 = vperm.xlu0 %1727, %v1710
        %v1729 = vpop.permute.xlu0 %1728
        %v1731 = vmul.f32 %v1347, %v1714
        %v1732 = vmul.f32 %v1394, %v1719
        %v1733 = vmul.f32 %v1441, %v1724
        %v1734 = vmul.f32 %v1488, %v1729
        %1736 = vset.pattern.permute.xlu0 0
        %1737 = vperm.xlu0 %1736, %v1683
        %v1738 = vpop.permute.xlu0 %1737
        %1741 = vset.pattern.permute.xlu0 0
        %1742 = vperm.xlu0 %1741, %v1684
        %v1743 = vpop.permute.xlu0 %1742
        %1746 = vset.pattern.permute.xlu0 0
        %1747 = vperm.xlu0 %1746, %v1685
        %v1748 = vpop.permute.xlu0 %1747
        %1751 = vset.pattern.permute.xlu0 0
        %1752 = vperm.xlu0 %1751, %v1686
        %v1753 = vpop.permute.xlu0 %1752
        %v1755 = vadd.f32 %v1731, %v1738
        %v1756 = vadd.f32 %v1732, %v1743
        %v1757 = vadd.f32 %v1733, %v1748
        %v1758 = vadd.f32 %v1734, %v1753
        %1759 = vset.pattern.permute.xlu0 1
        %1760 = vperm.xlu0 %1759, %v1707
        %v1761 = vpop.permute.xlu0 %1760
        %1763 = vset.pattern.permute.xlu0 1
        %1764 = vperm.xlu0 %1763, %v1708
        %v1765 = vpop.permute.xlu0 %1764
        %1767 = vset.pattern.permute.xlu0 1
        %1768 = vperm.xlu0 %1767, %v1709
        %v1769 = vpop.permute.xlu0 %1768
        %1771 = vset.pattern.permute.xlu0 1
        %1772 = vperm.xlu0 %1771, %v1710
        %v1773 = vpop.permute.xlu0 %1772
        %v1775 = vmul.f32 %v1347, %v1761
        %v1776 = vmul.f32 %v1394, %v1765
        %v1777 = vmul.f32 %v1441, %v1769
        %v1778 = vmul.f32 %v1488, %v1773
        %v1779 = vadd.f32 %v1775, %v1738
        %v1780 = vadd.f32 %v1776, %v1743
        %v1781 = vadd.f32 %v1777, %v1748
        %v1782 = vadd.f32 %v1778, %v1753
        %1783 = vset.pattern.permute.xlu0 2
        %1784 = vperm.xlu0 %1783, %v1707
        %v1785 = vpop.permute.xlu0 %1784
        %1787 = vset.pattern.permute.xlu0 2
        %1788 = vperm.xlu0 %1787, %v1708
        %v1789 = vpop.permute.xlu0 %1788
        %1791 = vset.pattern.permute.xlu0 2
        %1792 = vperm.xlu0 %1791, %v1709
        %v1793 = vpop.permute.xlu0 %1792
        %1795 = vset.pattern.permute.xlu0 2
        %1796 = vperm.xlu0 %1795, %v1710
        %v1797 = vpop.permute.xlu0 %1796
        %v1799 = vmul.f32 %v1347, %v1785
        %v1800 = vmul.f32 %v1394, %v1789
        %v1801 = vmul.f32 %v1441, %v1793
        %v1802 = vmul.f32 %v1488, %v1797
        %v1803 = vadd.f32 %v1799, %v1738
        %v1804 = vadd.f32 %v1800, %v1743
        %v1805 = vadd.f32 %v1801, %v1748
        %v1806 = vadd.f32 %v1802, %v1753
        %1807 = vset.pattern.permute.xlu0 3
        %1808 = vperm.xlu0 %1807, %v1707
        %v1809 = vpop.permute.xlu0 %1808
        %1811 = vset.pattern.permute.xlu0 3
        %1812 = vperm.xlu0 %1811, %v1708
        %v1813 = vpop.permute.xlu0 %1812
        %1815 = vset.pattern.permute.xlu0 3
        %1816 = vperm.xlu0 %1815, %v1709
        %v1817 = vpop.permute.xlu0 %1816
        %1819 = vset.pattern.permute.xlu0 3
        %1820 = vperm.xlu0 %1819, %v1710
        %v1821 = vpop.permute.xlu0 %1820
        %v1823 = vmul.f32 %v1347, %v1809
        %v1824 = vmul.f32 %v1394, %v1813
        %v1825 = vmul.f32 %v1441, %v1817
        %v1826 = vmul.f32 %v1488, %v1821
        %v1827 = vadd.f32 %v1823, %v1738
        %v1828 = vadd.f32 %v1824, %v1743
        %v1829 = vadd.f32 %v1825, %v1748
        %v1830 = vadd.f32 %v1826, %v1753
        %1831 = vset.pattern.permute.xlu0 4
        %1832 = vperm.xlu0 %1831, %v1707
        %v1833 = vpop.permute.xlu0 %1832
        %1835 = vset.pattern.permute.xlu0 4
        %1836 = vperm.xlu0 %1835, %v1708
        %v1837 = vpop.permute.xlu0 %1836
        %1839 = vset.pattern.permute.xlu0 4
        %1840 = vperm.xlu0 %1839, %v1709
        %v1841 = vpop.permute.xlu0 %1840
        %1843 = vset.pattern.permute.xlu0 4
        %1844 = vperm.xlu0 %1843, %v1710
        %v1845 = vpop.permute.xlu0 %1844
        %v1847 = vmul.f32 %v1347, %v1833
        %v1848 = vmul.f32 %v1394, %v1837
        %v1849 = vmul.f32 %v1441, %v1841
        %v1850 = vmul.f32 %v1488, %v1845
        %v1851 = vadd.f32 %v1847, %v1738
        %v1852 = vadd.f32 %v1848, %v1743
        %v1853 = vadd.f32 %v1849, %v1748
        %v1854 = vadd.f32 %v1850, %v1753
        %1855 = vset.pattern.permute.xlu0 5
        %1856 = vperm.xlu0 %1855, %v1707
        %v1857 = vpop.permute.xlu0 %1856
        %1859 = vset.pattern.permute.xlu0 5
        %1860 = vperm.xlu0 %1859, %v1708
        %v1861 = vpop.permute.xlu0 %1860
        %1863 = vset.pattern.permute.xlu0 5
        %1864 = vperm.xlu0 %1863, %v1709
        %v1865 = vpop.permute.xlu0 %1864
        %1867 = vset.pattern.permute.xlu0 5
        %1868 = vperm.xlu0 %1867, %v1710
        %v1869 = vpop.permute.xlu0 %1868
        %v1871 = vmul.f32 %v1347, %v1857
        %v1872 = vmul.f32 %v1394, %v1861
        %v1873 = vmul.f32 %v1441, %v1865
        %v1874 = vmul.f32 %v1488, %v1869
        %v1875 = vadd.f32 %v1871, %v1738
        %v1876 = vadd.f32 %v1872, %v1743
        %v1877 = vadd.f32 %v1873, %v1748
        %v1878 = vadd.f32 %v1874, %v1753
        %1879 = vset.pattern.permute.xlu0 6
        %1880 = vperm.xlu0 %1879, %v1707
        %v1881 = vpop.permute.xlu0 %1880
        %1883 = vset.pattern.permute.xlu0 6
        %1884 = vperm.xlu0 %1883, %v1708
        %v1885 = vpop.permute.xlu0 %1884
        %1887 = vset.pattern.permute.xlu0 6
        %1888 = vperm.xlu0 %1887, %v1709
        %v1889 = vpop.permute.xlu0 %1888
        %1891 = vset.pattern.permute.xlu0 6
        %1892 = vperm.xlu0 %1891, %v1710
        %v1893 = vpop.permute.xlu0 %1892
        %v1895 = vmul.f32 %v1347, %v1881
        %v1896 = vmul.f32 %v1394, %v1885
        %v1897 = vmul.f32 %v1441, %v1889
        %v1898 = vmul.f32 %v1488, %v1893
        %v1899 = vadd.f32 %v1895, %v1738
        %v1900 = vadd.f32 %v1896, %v1743
        %v1901 = vadd.f32 %v1897, %v1748
        %v1902 = vadd.f32 %v1898, %v1753
        %1903 = vset.pattern.permute.xlu0 7
        %1904 = vperm.xlu0 %1903, %v1707
        %v1905 = vpop.permute.xlu0 %1904
        %1907 = vset.pattern.permute.xlu0 7
        %1908 = vperm.xlu0 %1907, %v1708
        %v1909 = vpop.permute.xlu0 %1908
        %1911 = vset.pattern.permute.xlu0 7
        %1912 = vperm.xlu0 %1911, %v1709
        %v1913 = vpop.permute.xlu0 %1912
        %1915 = vset.pattern.permute.xlu0 7
        %1916 = vperm.xlu0 %1915, %v1710
        %v1917 = vpop.permute.xlu0 %1916
        %v1919 = vmul.f32 %v1347, %v1905
        %v1920 = vmul.f32 %v1394, %v1909
        %v1921 = vmul.f32 %v1441, %v1913
        %v1922 = vmul.f32 %v1488, %v1917
        %v1923 = vadd.f32 %v1919, %v1738
        %v1924 = vadd.f32 %v1920, %v1743
        %v1925 = vadd.f32 %v1921, %v1748
        %v1926 = vadd.f32 %v1922, %v1753
        %1931 = vrot.lane.b32.xlu0 %v1779, 64
        %v1932 = vpop.permute.xlu0 %1931
        %1933 = vrot.lane.b32.xlu0 %v1780, 64
        %v1934 = vpop.permute.xlu0 %1933
        %1935 = vrot.lane.b32.xlu0 %v1781, 64
        %v1936 = vpop.permute.xlu0 %1935
        %1937 = vrot.lane.b32.xlu0 %v1782, 64
        %v1938 = vpop.permute.xlu0 %1937
        %1947 = vrot.lane.b32.xlu0 %v1827, 64
        %v1948 = vpop.permute.xlu0 %1947
        %1949 = vrot.lane.b32.xlu0 %v1828, 64
        %v1950 = vpop.permute.xlu0 %1949
        %1951 = vrot.lane.b32.xlu0 %v1829, 64
        %v1952 = vpop.permute.xlu0 %1951
        %1953 = vrot.lane.b32.xlu0 %v1830, 64
        %v1954 = vpop.permute.xlu0 %1953
        %1963 = vrot.lane.b32.xlu0 %v1875, 64
        %v1964 = vpop.permute.xlu0 %1963
        %1965 = vrot.lane.b32.xlu0 %v1876, 64
        %v1966 = vpop.permute.xlu0 %1965
        %1967 = vrot.lane.b32.xlu0 %v1877, 64
        %v1968 = vpop.permute.xlu0 %1967
        %1969 = vrot.lane.b32.xlu0 %v1878, 64
        %v1970 = vpop.permute.xlu0 %1969
        %1979 = vrot.lane.b32.xlu0 %v1923, 64
        %v1980 = vpop.permute.xlu0 %1979
        %1981 = vrot.lane.b32.xlu0 %v1924, 64
        %v1982 = vpop.permute.xlu0 %1981
        %1983 = vrot.lane.b32.xlu0 %v1925, 64
        %v1984 = vpop.permute.xlu0 %1983
        %1985 = vrot.lane.b32.xlu0 %v1926, 64
        %v1986 = vpop.permute.xlu0 %1985
        %v1991 = vsel %vm949, %v1755, %v1932
        %v1992 = vsel %vm949, %v1756, %v1934
        %v1993 = vsel %vm949, %v1757, %v1936
        %v1994 = vsel %vm949, %v1758, %v1938
        %v1995 = vsel %vm949, %v1803, %v1948
        %v1996 = vsel %vm949, %v1804, %v1950
        %v1997 = vsel %vm949, %v1805, %v1952
        %v1998 = vsel %vm949, %v1806, %v1954
        %v1999 = vsel %vm949, %v1851, %v1964
        %v2000 = vsel %vm949, %v1852, %v1966
        %v2001 = vsel %vm949, %v1853, %v1968
        %v2002 = vsel %vm949, %v1854, %v1970
        %v2003 = vsel %vm949, %v1899, %v1980
        %v2004 = vsel %vm949, %v1900, %v1982
        %v2005 = vsel %vm949, %v1901, %v1984
        %v2006 = vsel %vm949, %v1902, %v1986
        %2007 = vst [vmem:[%s352] sm:$0xff] %v1991
        %2008 = vst [vmem:[%s352 + $0x8] sm:$0xff] %v1995
        %2009 = vst [vmem:[%s352 + $0x10] sm:$0xff] %v1999
        %2010 = vst [vmem:[%s352 + $0x18] sm:$0xff] %v2003
        %2011 = vst [vmem:[%s352 + $0x20] sm:$0xff] %v1992
        %2012 = vst [vmem:[%s352 + $0x28] sm:$0xff] %v1996
        %2013 = vst [vmem:[%s352 + $0x30] sm:$0xff] %v2000
        %2014 = vst [vmem:[%s352 + $0x38] sm:$0xff] %v2004
        %2015 = vst [vmem:[%s352 + $0x40] sm:$0xff] %v1993
        %2016 = vst [vmem:[%s352 + $0x48] sm:$0xff] %v1997
        %2017 = vst [vmem:[%s352 + $0x50] sm:$0xff] %v2001
        %2018 = vst [vmem:[%s352 + $0x58] sm:$0xff] %v2005
        %2019 = vst [vmem:[%s352 + $0x60] sm:$0xff] %v1994
        %2020 = vst [vmem:[%s352 + $0x68] sm:$0xff] %v1998
        %2021 = vst [vmem:[%s352 + $0x70] sm:$0xff] %v2002
        %2022 = vst [vmem:[%s352 + $0x78] sm:$0xff] %v2006
        %s2023 = sand.u32 %s247, 1
        %s2024 = scalar_lea.sflag [#allocation3], %s2023
        %s2025 = sand.u32 %s247, 1
        %s2026 = smul.addr %s2025, 128
        %s2027 = scalar_lea.vmem [#allocation2], %s2026
        // Predicated region
        $region61: #{tpu_custom_call.1} parent=59 // pred_check
          %p2028 = pneg %p257
        $region62: #{tpu_custom_call.1} parent=59 // pred_check_branch
          %2030 = sbr.rel (%p2028) target = $region64
        $region63: #{tpu_custom_call.1} parent=59 // pred_region
          %2032 = vsyncadd %s2024, 0
          %s2033 = smul.addr %s24, 16
          %s2034 = smul.addr %s2033, 8
          %s2035 = scalar_lea.hbm %s10, %s2034
          %s2036 = sshll.u32 %s2027, 4
          %s2037 = int_to_ptr.vmem [resolvable:$true] %s2036
          %s2038 = sshll.u32 %s2035, 4
          %s2039 = int_to_ptr.hbm [resolvable:$true] %s2038
          %2044 = dma.vmem_to_hbm [thread:$0]  %s2037, 2048, %s2039, %s2024, 512, 512, 32
        $region64: #{tpu_custom_call.1} parent=59 // pred_fallthru
          _
      $region60: #{tpu_custom_call.1} parent=5 // pred_fallthru
        _
      %p2045 = scmp.le.s32.totalorder 2, %s19
      // Predicated region
      $region65: #{tpu_custom_call.1} parent=5 // pred_check
        %p2046 = pneg %p2045
      $region66: #{tpu_custom_call.1} parent=5 // pred_check_branch
        %2048 = sbr.rel (%p2046) target = $region68
      $region67: #{tpu_custom_call.1} parent=5 // pred_region
        %s2049 = ssub.s32 %s19, 2
        // Predicated region
        $region69: #{tpu_custom_call.1} parent=67 // pred_check
          %p2050 = pneg %p263
        $region70: #{tpu_custom_call.1} parent=67 // pred_check_branch
          %2052 = sbr.rel (%p2050) target = $region72
        $region71: #{tpu_custom_call.1} parent=67 // pred_region
          %s2053 = sand.u32 %s248, 1
          %s2054 = scalar_lea.sflag [#allocation3], %s2053
          %s2055 = sand.u32 %s248, 1
          %s2056 = smul.addr %s2055, 128
          %s2057 = scalar_lea.vmem [#allocation2], %s2056
          %2059 = dma.done %s2054, 2048
        $region72: #{tpu_custom_call.1} parent=67 // pred_fallthru
          _
      $region68: #{tpu_custom_call.1} parent=5 // pred_fallthru
        _
    $region6: #{tpu_custom_call.1} parent=1 // loop_footer
      %s23 = sadd.s32 1, %s19
    $region7: #{tpu_custom_call.1} parent=1 // loop_footer_branch
      %18 = sbr.rel target = $region3
    $region8: #{tpu_custom_call.1} parent=1 // loop_exit
      _
    %2060 = vsyncpa [#allocation3], 1
    %s2061 = scalar_lea.sflag [#allocation3], 1
    %2062 = vsyncpa %s2061, 1

</llo_original>
